<compile_context>
chip_gen: v7x
topology: tpu7x:2x2x1
jax: 0.10.0
libtpu: 0.0.40
codegen_flags: <defaults>
</compile_context>

<pallas_src>
import jax
import jax.numpy as jnp
from jax.experimental import pallas as pl
from jax.experimental.pallas import tpu as pltpu


# ----------------------------------------------------------------------------
# Kernel factory
# ----------------------------------------------------------------------------
def make_basic_block_kernel(Bt, H, use_bf16_mxu, use_roll):
    """Kernel for a (Bt, H, W*C) lane-dense, batch-stacked activation block."""

    def kernel(x_ref, w1_ref, b1_ref, w2_ref, b2_ref, out_ref):
        M = Bt * H
        WCin = x_ref.shape[2]
        WCout = out_ref.shape[2]

        # (Bt, H, W*C) -> (Bt*H, W*C).  Only leading dims are merged; the
        # (sublane, lane) tile layout is unchanged, so this is free.
        x = x_ref[...].reshape(M, WCin)

        # Row-within-image index, used to mask the dy = +/-1 taps at image
        # boundaries so rolled/shifted rows never leak across stacked images
        # (and reproduce the H zero-padding of the 3x3 'same' conv).
        row = jax.lax.broadcasted_iota(jnp.int32, (M, 1), 0)
        row_in_img = row % H
        keep_up = row_in_img != 0           # row h-1 exists inside the image
        keep_down = row_in_img != (H - 1)   # row h+1 exists inside the image

        def shift_up(inp):
            # result[h] = inp[h-1] (wrapped row masked afterwards)
            if use_roll:
                return pltpu.roll(inp, shift=1, axis=0)
            zero_row = jnp.zeros((1, inp.shape[1]), jnp.float32)
            return jnp.concatenate([zero_row, inp[:-1, :]], axis=0)

        def shift_down(inp):
            # result[h] = inp[h+1] (wrapped row masked afterwards)
            if use_roll:
                return pltpu.roll(inp, shift=M - 1, axis=0)
            zero_row = jnp.zeros((1, inp.shape[1]), jnp.float32)
            return jnp.concatenate([inp[1:, :], zero_row], axis=0)

        def conv3x3_banded(inp, w_ref):
            # Block-banded formulation: the 3 dx taps + Cin contraction live
            # inside the (W*Cin, W*Cout) banded weight; the 3 dy taps are
            # fused into a single K = 3*W*Cin MXU contraction via lane-concat.
            up = jnp.where(keep_up, shift_up(inp), 0.0)
            down = jnp.where(keep_down, shift_down(inp), 0.0)
            lhs = jnp.concatenate([up, inp, down], axis=-1)   # (M, 3*W*Cin)
            if use_bf16_mxu:
                lhs = lhs.astype(jnp.bfloat16)
            return jnp.dot(lhs, w_ref[...], preferred_element_type=jnp.float32)

        # conv1 + BN1 (scale folded into w1) + ReLU  -- epilogue stays f32.
        out1 = jnp.maximum(conv3x3_banded(x, w1_ref) + b1_ref[...], 0.0)
        # conv2 + BN2 + residual (f32 input) + ReLU.
        out2 = conv3x3_banded(out1, w2_ref) + b2_ref[...]
        y = jnp.maximum(out2 + x, 0.0)
        out_ref[...] = y.reshape(Bt, H, WCout)

    return kernel


# ----------------------------------------------------------------------------
# Wrapper-side parameter preparation (plain JAX glue, runs once)
# ----------------------------------------------------------------------------
def fold_bn(gamma, beta, running_mean, running_var, eps=1e-5):
    scale = gamma / jnp.sqrt(running_var + eps)
    bias = beta - running_mean * scale
    return scale, bias


def make_banded_weights(w_hwio, W):
    """Fold the 3 dx taps + Cin contraction of a 3x3 conv into per-dy
    block-banded matrices, then fuse the 3 dy taps into one K dimension.

    w_hwio: (3, 3, Cin, Cout)  ->  (3*W*Cin, W*Cout)
    banded[dy][w_in*Cin+ci, w_out*Cout+co] = w[dy, w_in-w_out+1, ci, co]
    when |w_in - w_out| <= 1, else 0 (this is exactly the W zero-padding).
    Row ordering matches the in-kernel LHS concat order [up, center, down].
    """
    w_in = jnp.arange(W)[:, None]   # (W, 1)
    w_out = jnp.arange(W)[None, :]  # (1, W)
    sel = jnp.stack([(w_in == w_out + dx - 1) for dx in range(3)], axis=0)
    sel = sel.astype(w_hwio.dtype)  # (3, W, W)
    Cin, Cout = w_hwio.shape[2], w_hwio.shape[3]
    banded = jnp.einsum('ydio,dab->yaibo', w_hwio, sel)  # (3, W, Cin, W, Cout)
    return banded.reshape(3 * W * Cin, W * Cout)


def prepare_params(params, W, use_bf16_mxu=False):
    w1, g1, be1, rm1, rv1, w2, g2, be2, rm2, rv2 = params
    Cout = w1.shape[-1]
    s1, b1 = fold_bn(g1, be1, rm1, rv1)
    s2, b2 = fold_bn(g2, be2, rm2, rv2)

    # Fold BN scales into the conv weights (HWIO, scale over output channel).
    w1f = (w1 * s1[None, None, None, :]).astype(jnp.float32)
    w2f = (w2 * s2[None, None, None, :]).astype(jnp.float32)

    wdt = jnp.bfloat16 if use_bf16_mxu else jnp.float32
    w1b = make_banded_weights(w1f, W).astype(wdt)   # (3*W*Cin,  W*Cout)
    w2b = make_banded_weights(w2f, W).astype(wdt)   # (3*W*Cout, W*Cout)

    b1w = jnp.tile(b1, W).reshape(1, W * Cout).astype(jnp.float32)
    b2w = jnp.tile(b2, W).reshape(1, W * Cout).astype(jnp.float32)
    return w1b, b1w, w2b, b2w


def _choose_batch_tile(N, H, max_rows_per_step=512):
    # Prefer >= 2 grid steps (v7x has 2 TensorCores to feed) but cap the
    # number of stacked rows per step so intermediates stay well inside VMEM.
    cap = max(1, max_rows_per_step // H)
    target = N // 2 if (N >= 2 and N % 2 == 0) else N
    bt = max(1, min(target, cap))
    while N % bt:
        bt -= 1
    return bt


# ----------------------------------------------------------------------------
# Pallas entry points
# ----------------------------------------------------------------------------
def basic_block_pallas_lane_dense(x_fl, w1b, b1w, w2b, b2w, *, H, W, Cin, Cout,
                                  batch_tile=None, use_bf16_mxu=False):
    """Lane-dense entry point: x_fl is (N, H, W*Cin) float32, output is
    (N, H, W*Cout) float32.  Use this directly to avoid NCHW transposes."""
    N = x_fl.shape[0]
    if batch_tile is None:
        batch_tile = _choose_batch_tile(N, H)
    assert N % batch_tile == 0
    Bt = batch_tile
    grid = (N // Bt,)

    def _call(use_roll):
        kernel = make_basic_block_kernel(Bt, H, use_bf16_mxu, use_roll)
        return pl.pallas_call(
            kernel,
            out_shape=jax.ShapeDtypeStruct((N, H, W * Cout), jnp.float32),
            grid=grid,
            in_specs=[
                pl.BlockSpec((Bt, H, W * Cin), lambda n: (n, 0, 0)),       # x
                pl.BlockSpec((3 * W * Cin, W * Cout), lambda n: (0, 0)),   # w1
                pl.BlockSpec((1, W * Cout), lambda n: (0, 0)),             # b1
                pl.BlockSpec((3 * W * Cout, W * Cout), lambda n: (0, 0)),  # w2
                pl.BlockSpec((1, W * Cout), lambda n: (0, 0)),             # b2
            ],
            out_specs=pl.BlockSpec((Bt, H, W * Cout), lambda n: (n, 0, 0)),
            compiler_params=pltpu.CompilerParams(
                dimension_semantics=("parallel",),
                # Explicit scoped-VMEM limit (raise further if blocks grow).
                vmem_limit_bytes=32 * 1024 * 1024),
        )(x_fl, w1b, b1w, w2b, b2w)

    try:
        return _call(use_roll=True)
    except Exception:
        # Fallback if the sublane pltpu.roll path fails to lower on this chip.
        return _call(use_roll=False)


def basic_block_pallas(x_nchw, params, *, batch_tile=None, use_bf16_mxu=False):
    """NCHW adapter matching the PyTorch module layout.
    x_nchw: (N, Cin, H, W) float32. Returns (N, Cout, H, W) float32.
    NOTE: the two transposes here are layout adapters only; prefer the
    lane-dense entry point inside a larger model to avoid the HBM round-trips.
    """
    N, Cin, H, W = x_nchw.shape
    Cout = params[0].shape[-1]
    assert Cin == Cout, "residual add assumes no downsample (Cin == Cout, stride 1)"

    w1b, b1w, w2b, b2w = prepare_params(params, W, use_bf16_mxu=use_bf16_mxu)

    # NCHW -> lane-dense (N, H, W*Cin).  No zero-padded copy is materialized.
    x_fl = jnp.transpose(x_nchw, (0, 2, 3, 1)).reshape(N, H, W * Cin)
    x_fl = x_fl.astype(jnp.float32)

    out_fl = basic_block_pallas_lane_dense(
        x_fl, w1b, b1w, w2b, b2w, H=H, W=W, Cin=Cin, Cout=Cout,
        batch_tile=batch_tile, use_bf16_mxu=use_bf16_mxu)

    # (N, H, W*Cout) -> (N, Cout, H, W)
    return jnp.transpose(out_fl.reshape(N, H, W, Cout), (0, 3, 1, 2))


# ----------------------------------------------------------------------------
# Pure-JAX reference (inference-mode BN) for correctness checking
# ----------------------------------------------------------------------------
def basic_block_reference(x_nchw, params):
    w1, g1, be1, rm1, rv1, w2, g2, be2, rm2, rv2 = params
    x = jnp.transpose(x_nchw, (0, 2, 3, 1))

    def conv3x3(x, w):
        return jax.lax.conv_general_dilated(
            x, w, window_strides=(1, 1), padding=((1, 1), (1, 1)),
            dimension_numbers=('NHWC', 'HWIO', 'NHWC'))

    def bn(x, g, b, rm, rv, eps=1e-5):
        return (x - rm) / jnp.sqrt(rv + eps) * g + b

    out = jax.nn.relu(bn(conv3x3(x, w1), g1, be1, rm1, rv1))
    out = bn(conv3x3(out, w2), g2, be2, rm2, rv2)
    out = jax.nn.relu(out + x)
    return jnp.transpose(out, (0, 3, 1, 2))


if __name__ == "__main__":
    # Small shapes: batch=4, inplanes=planes=8, spatial=16, stride=1, no downsample.
    # W * C = 128 -> exactly one full lane group (fully lane-dense output).
    # batch=4 exercises the batch-stacked path (2 grid steps x 2 images/step).
    N, C, H, W = 4, 8, 16, 16
    planes = C

    key = jax.random.PRNGKey(0)
    (kx, kw1, kw2, kg1, kb1, krm1, krv1,
     kg2, kb2, krm2, krv2) = jax.random.split(key, 11)

    x = jax.random.normal(kx, (N, C, H, W), dtype=jnp.float32)

    # Deterministic parameter init (HWIO conv weights, BN affine + running stats).
    w1 = jax.random.normal(kw1, (3, 3, C, planes), dtype=jnp.float32) * 0.1
    w2 = jax.random.normal(kw2, (3, 3, planes, planes), dtype=jnp.float32) * 0.1
    g1 = 1.0 + 0.1 * jax.random.normal(kg1, (planes,), dtype=jnp.float32)
    be1 = 0.1 * jax.random.normal(kb1, (planes,), dtype=jnp.float32)
    rm1 = 0.1 * jax.random.normal(krm1, (planes,), dtype=jnp.float32)
    rv1 = 1.0 + 0.1 * jnp.abs(jax.random.normal(krv1, (planes,), dtype=jnp.float32))
    g2 = 1.0 + 0.1 * jax.random.normal(kg2, (planes,), dtype=jnp.float32)
    be2 = 0.1 * jax.random.normal(kb2, (planes,), dtype=jnp.float32)
    rm2 = 0.1 * jax.random.normal(krm2, (planes,), dtype=jnp.float32)
    rv2 = 1.0 + 0.1 * jnp.abs(jax.random.normal(krv2, (planes,), dtype=jnp.float32))

    params = (w1, g1, be1, rm1, rv1, w2, g2, be2, rm2, rv2)

    ref = jax.block_until_ready(basic_block_reference(x, params))

    # f32 MXU path: exact parity with the f32 reference.
    out = jax.block_until_ready(basic_block_pallas(x, params))
    assert out.shape == (N, planes, H, W)
    assert jnp.allclose(out, ref, atol=1e-4, rtol=1e-4), "f32 mismatch vs JAX reference"

    # bf16 MXU operand path (v6e/v7x throughput lever): f32 accumulation and
    # f32 epilogue, checked against the f32 reference at a looser tolerance.
    out_bf16 = jax.block_until_ready(basic_block_pallas(x, params, use_bf16_mxu=True))
    assert jnp.allclose(out_bf16, ref, atol=1e-1, rtol=1e-1), "bf16 mismatch vs JAX reference"

    print("KERNEL_OK")
</pallas_src>

<mosaic_0001>
module attributes {stable_mosaic.version = 11 : i64} {
  func.func @kernel(%arg0: i32, %arg1: memref<2x16x128xf32, #tpu.memory_space<vmem>>, %arg2: memref<384x128xf32, #tpu.memory_space<vmem>>, %arg3: memref<1x128xf32, #tpu.memory_space<vmem>>, %arg4: memref<384x128xf32, #tpu.memory_space<vmem>>, %arg5: memref<1x128xf32, #tpu.memory_space<vmem>>, %arg6: memref<2x16x128xf32, #tpu.memory_space<vmem>>) attributes {dimension_semantics = [#tpu.dimension_semantics<parallel>], iteration_bounds = array<i64: 2>, scalar_prefetch = 0 : i64, scratch_operands = 0 : i64, tpu.core_type = #tpu.core_type<tc>, window_params = [{transform_indices = @transform_0, window_bounds = array<i64: 2, 16, 128>}, {pipeline_mode = #tpu.pipeline_mode<synchronous>, transform_indices = @transform_1, window_bounds = array<i64: 384, 128>}, {pipeline_mode = #tpu.pipeline_mode<synchronous>, transform_indices = @transform_2, window_bounds = array<i64: 1, 128>}, {pipeline_mode = #tpu.pipeline_mode<synchronous>, transform_indices = @transform_3, window_bounds = array<i64: 384, 128>}, {pipeline_mode = #tpu.pipeline_mode<synchronous>, transform_indices = @transform_4, window_bounds = array<i64: 1, 128>}, {transform_indices = @transform_5, window_bounds = array<i64: 2, 16, 128>}]} {
    %c0 = arith.constant 0 : index
    %c0_0 = arith.constant 0 : index
    %c0_1 = arith.constant 0 : index
    %0 = vector.load %arg1[%c0, %c0_0, %c0_1] : memref<2x16x128xf32, #tpu.memory_space<vmem>>, vector<2x16x128xf32>
    %1 = vector.shape_cast %0 : vector<2x16x128xf32> to vector<32x128xf32>
    %2 = tpu.iota {dimensions = array<i32: 0>} : vector<32x1xi32>
    %c16_i32 = arith.constant 16 : i32
    %c0_i32 = arith.constant 0 : i32
    %3 = arith.cmpi eq, %c16_i32, %c0_i32 : i32
    %c1_i32 = arith.constant 1 : i32
    %4 = arith.select %3, %c1_i32, %c16_i32 : i32
    %5 = vector.broadcast %4 : i32 to vector<32x1xi32>
    %6 = arith.remsi %2, %5 : vector<32x1xi32>
    %c0_i32_2 = arith.constant 0 : i32
    %7 = vector.broadcast %c0_i32_2 : i32 to vector<32x1xi32>
    %8 = arith.cmpi ne, %6, %7 : vector<32x1xi32>
    %c0_i32_3 = arith.constant 0 : i32
    %9 = vector.broadcast %c0_i32_3 : i32 to vector<32x1xi32>
    %10 = arith.cmpi slt, %6, %9 : vector<32x1xi32>
    %c0_i32_4 = arith.constant 0 : i32
    %11 = arith.cmpi slt, %4, %c0_i32_4 : i32
    %12 = vector.broadcast %11 : i1 to vector<32x1xi1>
    %13 = vector.broadcast %12 : vector<32x1xi1> to vector<32x1xi1>
    %14 = arith.xori %10, %13 : vector<32x1xi1>
    %15 = arith.andi %14, %8 : vector<32x1xi1>
    %16 = vector.broadcast %4 : i32 to vector<32x1xi32>
    %17 = arith.addi %6, %16 : vector<32x1xi32>
    %18 = arith.select %15, %17, %6 : vector<32x1xi1>, vector<32x1xi32>
    %c0_i32_5 = arith.constant 0 : i32
    %19 = vector.broadcast %c0_i32_5 : i32 to vector<32x1xi32>
    %20 = arith.cmpi ne, %18, %19 : vector<32x1xi32>
    %c15_i32 = arith.constant 15 : i32
    %21 = vector.broadcast %c15_i32 : i32 to vector<32x1xi32>
    %22 = arith.cmpi ne, %18, %21 : vector<32x1xi32>
    %c1_i32_6 = arith.constant 1 : i32
    %23 = tpu.dynamic_rotate %1 by %c1_i32_6 dim 0 : vector<32x128xf32>, i32 -> vector<32x128xf32>
    %cst = arith.constant 0.000000e+00 : f32
    %24 = vector.shape_cast %20 : vector<32x1xi1> to vector<32x1xi1>
    %25 = vector.broadcast %24 : vector<32x1xi1> to vector<32x128xi1>
    %26 = vector.broadcast %cst : f32 to vector<32x128xf32>
    %27 = arith.select %25, %23, %26 : vector<32x128xi1>, vector<32x128xf32>
    %c31_i32 = arith.constant 31 : i32
    %28 = tpu.dynamic_rotate %1 by %c31_i32 dim 0 : vector<32x128xf32>, i32 -> vector<32x128xf32>
    %cst_7 = arith.constant 0.000000e+00 : f32
    %29 = vector.shape_cast %22 : vector<32x1xi1> to vector<32x1xi1>
    %30 = vector.broadcast %29 : vector<32x1xi1> to vector<32x128xi1>
    %31 = vector.broadcast %cst_7 : f32 to vector<32x128xf32>
    %32 = arith.select %30, %28, %31 : vector<32x128xi1>, vector<32x128xf32>
    %33 = tpu.concatenate %27, %1, %32 in 1 : vector<32x128xf32>, vector<32x128xf32>, vector<32x128xf32> -> vector<32x384xf32>
    %c0_8 = arith.constant 0 : index
    %c0_9 = arith.constant 0 : index
    %34 = vector.load %arg2[%c0_8, %c0_9] : memref<384x128xf32, #tpu.memory_space<vmem>>, vector<384x128xf32>
    %cst_10 = arith.constant dense<0.000000e+00> : vector<32x128xf32>
    %35 = tpu.matmul %33, %34, %cst_10 {dimension_numbers = #tpu.dot_dimension_numbers<[1], [0], [0], [1], [0, 0, 1, 1], [], []>} : vector<32x384xf32>, vector<384x128xf32>, vector<32x128xf32> -> vector<32x128xf32>
    %c0_11 = arith.constant 0 : index
    %c0_12 = arith.constant 0 : index
    %36 = vector.load %arg3[%c0_11, %c0_12] : memref<1x128xf32, #tpu.memory_space<vmem>>, vector<1x128xf32>
    %37 = vector.broadcast %36 : vector<1x128xf32> to vector<32x128xf32>
    %38 = arith.addf %35, %37 : vector<32x128xf32>
    %cst_13 = arith.constant 0.000000e+00 : f32
    %39 = vector.broadcast %cst_13 : f32 to vector<32x128xf32>
    %40 = arith.maximumf %38, %39 : vector<32x128xf32>
    %c1_i32_14 = arith.constant 1 : i32
    %41 = tpu.dynamic_rotate %40 by %c1_i32_14 dim 0 : vector<32x128xf32>, i32 -> vector<32x128xf32>
    %cst_15 = arith.constant 0.000000e+00 : f32
    %42 = vector.shape_cast %20 : vector<32x1xi1> to vector<32x1xi1>
    %43 = vector.broadcast %42 : vector<32x1xi1> to vector<32x128xi1>
    %44 = vector.broadcast %cst_15 : f32 to vector<32x128xf32>
    %45 = arith.select %43, %41, %44 : vector<32x128xi1>, vector<32x128xf32>
    %c31_i32_16 = arith.constant 31 : i32
    %46 = tpu.dynamic_rotate %40 by %c31_i32_16 dim 0 : vector<32x128xf32>, i32 -> vector<32x128xf32>
    %cst_17 = arith.constant 0.000000e+00 : f32
    %47 = vector.shape_cast %22 : vector<32x1xi1> to vector<32x1xi1>
    %48 = vector.broadcast %47 : vector<32x1xi1> to vector<32x128xi1>
    %49 = vector.broadcast %cst_17 : f32 to vector<32x128xf32>
    %50 = arith.select %48, %46, %49 : vector<32x128xi1>, vector<32x128xf32>
    %51 = tpu.concatenate %45, %40, %50 in 1 : vector<32x128xf32>, vector<32x128xf32>, vector<32x128xf32> -> vector<32x384xf32>
    %c0_18 = arith.constant 0 : index
    %c0_19 = arith.constant 0 : index
    %52 = vector.load %arg4[%c0_18, %c0_19] : memref<384x128xf32, #tpu.memory_space<vmem>>, vector<384x128xf32>
    %cst_20 = arith.constant dense<0.000000e+00> : vector<32x128xf32>
    %53 = tpu.matmul %51, %52, %cst_20 {dimension_numbers = #tpu.dot_dimension_numbers<[1], [0], [0], [1], [0, 0, 1, 1], [], []>} : vector<32x384xf32>, vector<384x128xf32>, vector<32x128xf32> -> vector<32x128xf32>
    %c0_21 = arith.constant 0 : index
    %c0_22 = arith.constant 0 : index
    %54 = vector.load %arg5[%c0_21, %c0_22] : memref<1x128xf32, #tpu.memory_space<vmem>>, vector<1x128xf32>
    %55 = vector.broadcast %54 : vector<1x128xf32> to vector<32x128xf32>
    %56 = arith.addf %53, %55 : vector<32x128xf32>
    %57 = arith.addf %56, %1 : vector<32x128xf32>
    %cst_23 = arith.constant 0.000000e+00 : f32
    %58 = vector.broadcast %cst_23 : f32 to vector<32x128xf32>
    %59 = arith.maximumf %57, %58 : vector<32x128xf32>
    %60 = vector.shape_cast %59 : vector<32x128xf32> to vector<2x16x128xf32>
    %c0_24 = arith.constant 0 : index
    %c0_25 = arith.constant 0 : index
    %c0_26 = arith.constant 0 : index
    %61 = vector.load %arg6[%c0_24, %c0_25, %c0_26] : memref<2x16x128xf32, #tpu.memory_space<vmem>>, vector<2x16x128xf32>
    tpu.vector_store %arg6[%c0_24, %c0_25, %c0_26], %60 {strides = array<i32>} : memref<2x16x128xf32, #tpu.memory_space<vmem>>, vector<2x16x128xf32>,
    return
  }
  func.func @transform_0(%arg0: i32) -> (i32, i32, i32) {
    %c0_i32 = arith.constant 0 : i32
    %c0_i32_0 = arith.constant 0 : i32
    %c0_i32_1 = arith.constant 0 : i32
    return %arg0, %c0_i32, %c0_i32_0 : i32, i32, i32
  }
  func.func @transform_1(%arg0: i32) -> (i32, i32) {
    %c0_i32 = arith.constant 0 : i32
    %c0_i32_0 = arith.constant 0 : i32
    %c0_i32_1 = arith.constant 0 : i32
    return %c0_i32, %c0_i32_0 : i32, i32
  }
  func.func @transform_2(%arg0: i32) -> (i32, i32) {
    %c0_i32 = arith.constant 0 : i32
    %c0_i32_0 = arith.constant 0 : i32
    %c0_i32_1 = arith.constant 0 : i32
    return %c0_i32, %c0_i32_0 : i32, i32
  }
  func.func @transform_3(%arg0: i32) -> (i32, i32) {
    %c0_i32 = arith.constant 0 : i32
    %c0_i32_0 = arith.constant 0 : i32
    %c0_i32_1 = arith.constant 0 : i32
    return %c0_i32, %c0_i32_0 : i32, i32
  }
  func.func @transform_4(%arg0: i32) -> (i32, i32) {
    %c0_i32 = arith.constant 0 : i32
    %c0_i32_0 = arith.constant 0 : i32
    %c0_i32_1 = arith.constant 0 : i32
    return %c0_i32, %c0_i32_0 : i32, i32
  }
  func.func @transform_5(%arg0: i32) -> (i32, i32, i32) {
    %c0_i32 = arith.constant 0 : i32
    %c0_i32_0 = arith.constant 0 : i32
    %c0_i32_1 = arith.constant 0 : i32
    return %arg0, %c0_i32, %c0_i32_0 : i32, i32, i32
  }
}

module attributes {stable_mosaic.version = 11 : i64} {
  func.func @kernel(%arg0: i32, %arg1: memref<2x16x128xf32, #tpu.memory_space<vmem>>, %arg2: memref<384x128xf32, #tpu.memory_space<vmem>>, %arg3: memref<1x128xf32, #tpu.memory_space<vmem>>, %arg4: memref<384x128xf32, #tpu.memory_space<vmem>>, %arg5: memref<1x128xf32, #tpu.memory_space<vmem>>, %arg6: memref<2x16x128xf32, #tpu.memory_space<vmem>>) attributes {dimension_semantics = [#tpu.dimension_semantics<parallel>], iteration_bounds = array<i64: 2>, scalar_prefetch = 0 : i64, scratch_operands = 0 : i64, tpu.core_type = #tpu.core_type<tc>, window_params = [{transform_indices = @transform_0, window_bounds = array<i64: 2, 16, 128>}, {pipeline_mode = #tpu.pipeline_mode<synchronous>, transform_indices = @transform_1, window_bounds = array<i64: 384, 128>}, {pipeline_mode = #tpu.pipeline_mode<synchronous>, transform_indices = @transform_2, window_bounds = array<i64: 1, 128>}, {pipeline_mode = #tpu.pipeline_mode<synchronous>, transform_indices = @transform_3, window_bounds = array<i64: 384, 128>}, {pipeline_mode = #tpu.pipeline_mode<synchronous>, transform_indices = @transform_4, window_bounds = array<i64: 1, 128>}, {transform_indices = @transform_5, window_bounds = array<i64: 2, 16, 128>}]} {
    %c0 = arith.constant 0 : index
    %c0_0 = arith.constant 0 : index
    %c0_1 = arith.constant 0 : index
    %0 = vector.load %arg1[%c0, %c0_0, %c0_1] : memref<2x16x128xf32, #tpu.memory_space<vmem>>, vector<2x16x128xf32>
    %1 = vector.shape_cast %0 : vector<2x16x128xf32> to vector<32x128xf32>
    %2 = tpu.iota {dimensions = array<i32: 0>} : vector<32x1xi32>
    %c16_i32 = arith.constant 16 : i32
    %c0_i32 = arith.constant 0 : i32
    %3 = arith.cmpi eq, %c16_i32, %c0_i32 : i32
    %c1_i32 = arith.constant 1 : i32
    %4 = arith.select %3, %c1_i32, %c16_i32 : i32
    %5 = vector.broadcast %4 : i32 to vector<32x1xi32>
    %6 = arith.remsi %2, %5 : vector<32x1xi32>
    %c0_i32_2 = arith.constant 0 : i32
    %7 = vector.broadcast %c0_i32_2 : i32 to vector<32x1xi32>
    %8 = arith.cmpi ne, %6, %7 : vector<32x1xi32>
    %c0_i32_3 = arith.constant 0 : i32
    %9 = vector.broadcast %c0_i32_3 : i32 to vector<32x1xi32>
    %10 = arith.cmpi slt, %6, %9 : vector<32x1xi32>
    %c0_i32_4 = arith.constant 0 : i32
    %11 = arith.cmpi slt, %4, %c0_i32_4 : i32
    %12 = vector.broadcast %11 : i1 to vector<32x1xi1>
    %13 = vector.broadcast %12 : vector<32x1xi1> to vector<32x1xi1>
    %14 = arith.xori %10, %13 : vector<32x1xi1>
    %15 = arith.andi %14, %8 : vector<32x1xi1>
    %16 = vector.broadcast %4 : i32 to vector<32x1xi32>
    %17 = arith.addi %6, %16 : vector<32x1xi32>
    %18 = arith.select %15, %17, %6 : vector<32x1xi1>, vector<32x1xi32>
    %c0_i32_5 = arith.constant 0 : i32
    %19 = vector.broadcast %c0_i32_5 : i32 to vector<32x1xi32>
    %20 = arith.cmpi ne, %18, %19 : vector<32x1xi32>
    %c15_i32 = arith.constant 15 : i32
    %21 = vector.broadcast %c15_i32 : i32 to vector<32x1xi32>
    %22 = arith.cmpi ne, %18, %21 : vector<32x1xi32>
    %cst = arith.constant 0.000000e+00 : f32
    %23 = vector.broadcast %cst : f32 to vector<1x128xf32>
    %24 = vector.extract_strided_slice %1 {offsets = [0, 0], sizes = [31, 128], strides = [1, 1]} : vector<32x128xf32> to vector<31x128xf32>
    %25 = tpu.concatenate %23, %24 in 0 : vector<1x128xf32>, vector<31x128xf32> -> vector<32x128xf32>
    %cst_6 = arith.constant 0.000000e+00 : f32
    %26 = vector.shape_cast %20 : vector<32x1xi1> to vector<32x1xi1>
    %27 = vector.broadcast %26 : vector<32x1xi1> to vector<32x128xi1>
    %28 = vector.broadcast %cst_6 : f32 to vector<32x128xf32>
    %29 = arith.select %27, %25, %28 : vector<32x128xi1>, vector<32x128xf32>
    %cst_7 = arith.constant 0.000000e+00 : f32
    %30 = vector.broadcast %cst_7 : f32 to vector<1x128xf32>
    %31 = vector.extract_strided_slice %1 {offsets = [1, 0], sizes = [31, 128], strides = [1, 1]} : vector<32x128xf32> to vector<31x128xf32>
    %32 = tpu.concatenate %31, %30 in 0 : vector<31x128xf32>, vector<1x128xf32> -> vector<32x128xf32>
    %cst_8 = arith.constant 0.000000e+00 : f32
    %33 = vector.shape_cast %22 : vector<32x1xi1> to vector<32x1xi1>
    %34 = vector.broadcast %33 : vector<32x1xi1> to vector<32x128xi1>
    %35 = vector.broadcast %cst_8 : f32 to vector<32x128xf32>
    %36 = arith.select %34, %32, %35 : vector<32x128xi1>, vector<32x128xf32>
    %37 = tpu.concatenate %29, %1, %36 in 1 : vector<32x128xf32>, vector<32x128xf32>, vector<32x128xf32> -> vector<32x384xf32>
    %c0_9 = arith.constant 0 : index
    %c0_10 = arith.constant 0 : index
    %38 = vector.load %arg2[%c0_9, %c0_10] : memref<384x128xf32, #tpu.memory_space<vmem>>, vector<384x128xf32>
    %cst_11 = arith.constant dense<0.000000e+00> : vector<32x128xf32>
    %39 = tpu.matmul %37, %38, %cst_11 {dimension_numbers = #tpu.dot_dimension_numbers<[1], [0], [0], [1], [0, 0, 1, 1], [], []>} : vector<32x384xf32>, vector<384x128xf32>, vector<32x128xf32> -> vector<32x128xf32>
    %c0_12 = arith.constant 0 : index
    %c0_13 = arith.constant 0 : index
    %40 = vector.load %arg3[%c0_12, %c0_13] : memref<1x128xf32, #tpu.memory_space<vmem>>, vector<1x128xf32>
    %41 = vector.broadcast %40 : vector<1x128xf32> to vector<32x128xf32>
    %42 = arith.addf %39, %41 : vector<32x128xf32>
    %cst_14 = arith.constant 0.000000e+00 : f32
    %43 = vector.broadcast %cst_14 : f32 to vector<32x128xf32>
    %44 = arith.maximumf %42, %43 : vector<32x128xf32>
    %cst_15 = arith.constant 0.000000e+00 : f32
    %45 = vector.broadcast %cst_15 : f32 to vector<1x128xf32>
    %46 = vector.extract_strided_slice %44 {offsets = [0, 0], sizes = [31, 128], strides = [1, 1]} : vector<32x128xf32> to vector<31x128xf32>
    %47 = tpu.concatenate %45, %46 in 0 : vector<1x128xf32>, vector<31x128xf32> -> vector<32x128xf32>
    %cst_16 = arith.constant 0.000000e+00 : f32
    %48 = vector.shape_cast %20 : vector<32x1xi1> to vector<32x1xi1>
    %49 = vector.broadcast %48 : vector<32x1xi1> to vector<32x128xi1>
    %50 = vector.broadcast %cst_16 : f32 to vector<32x128xf32>
    %51 = arith.select %49, %47, %50 : vector<32x128xi1>, vector<32x128xf32>
    %cst_17 = arith.constant 0.000000e+00 : f32
    %52 = vector.broadcast %cst_17 : f32 to vector<1x128xf32>
    %53 = vector.extract_strided_slice %44 {offsets = [1, 0], sizes = [31, 128], strides = [1, 1]} : vector<32x128xf32> to vector<31x128xf32>
    %54 = tpu.concatenate %53, %52 in 0 : vector<31x128xf32>, vector<1x128xf32> -> vector<32x128xf32>
    %cst_18 = arith.constant 0.000000e+00 : f32
    %55 = vector.shape_cast %22 : vector<32x1xi1> to vector<32x1xi1>
    %56 = vector.broadcast %55 : vector<32x1xi1> to vector<32x128xi1>
    %57 = vector.broadcast %cst_18 : f32 to vector<32x128xf32>
    %58 = arith.select %56, %54, %57 : vector<32x128xi1>, vector<32x128xf32>
    %59 = tpu.concatenate %51, %44, %58 in 1 : vector<32x128xf32>, vector<32x128xf32>, vector<32x128xf32> -> vector<32x384xf32>
    %c0_19 = arith.constant 0 : index
    %c0_20 = arith.constant 0 : index
    %60 = vector.load %arg4[%c0_19, %c0_20] : memref<384x128xf32, #tpu.memory_space<vmem>>, vector<384x128xf32>
    %cst_21 = arith.constant dense<0.000000e+00> : vector<32x128xf32>
    %61 = tpu.matmul %59, %60, %cst_21 {dimension_numbers = #tpu.dot_dimension_numbers<[1], [0], [0], [1], [0, 0, 1, 1], [], []>} : vector<32x384xf32>, vector<384x128xf32>, vector<32x128xf32> -> vector<32x128xf32>
    %c0_22 = arith.constant 0 : index
    %c0_23 = arith.constant 0 : index
    %62 = vector.load %arg5[%c0_22, %c0_23] : memref<1x128xf32, #tpu.memory_space<vmem>>, vector<1x128xf32>
    %63 = vector.broadcast %62 : vector<1x128xf32> to vector<32x128xf32>
    %64 = arith.addf %61, %63 : vector<32x128xf32>
    %65 = arith.addf %64, %1 : vector<32x128xf32>
    %cst_24 = arith.constant 0.000000e+00 : f32
    %66 = vector.broadcast %cst_24 : f32 to vector<32x128xf32>
    %67 = arith.maximumf %65, %66 : vector<32x128xf32>
    %68 = vector.shape_cast %67 : vector<32x128xf32> to vector<2x16x128xf32>
    %c0_25 = arith.constant 0 : index
    %c0_26 = arith.constant 0 : index
    %c0_27 = arith.constant 0 : index
    %69 = vector.load %arg6[%c0_25, %c0_26, %c0_27] : memref<2x16x128xf32, #tpu.memory_space<vmem>>, vector<2x16x128xf32>
    tpu.vector_store %arg6[%c0_25, %c0_26, %c0_27], %68 {strides = array<i32>} : memref<2x16x128xf32, #tpu.memory_space<vmem>>, vector<2x16x128xf32>,
    return
  }
  func.func @transform_0(%arg0: i32) -> (i32, i32, i32) {
    %c0_i32 = arith.constant 0 : i32
    %c0_i32_0 = arith.constant 0 : i32
    %c0_i32_1 = arith.constant 0 : i32
    return %arg0, %c0_i32, %c0_i32_0 : i32, i32, i32
  }
  func.func @transform_1(%arg0: i32) -> (i32, i32) {
    %c0_i32 = arith.constant 0 : i32
    %c0_i32_0 = arith.constant 0 : i32
    %c0_i32_1 = arith.constant 0 : i32
    return %c0_i32, %c0_i32_0 : i32, i32
  }
  func.func @transform_2(%arg0: i32) -> (i32, i32) {
    %c0_i32 = arith.constant 0 : i32
    %c0_i32_0 = arith.constant 0 : i32
    %c0_i32_1 = arith.constant 0 : i32
    return %c0_i32, %c0_i32_0 : i32, i32
  }
  func.func @transform_3(%arg0: i32) -> (i32, i32) {
    %c0_i32 = arith.constant 0 : i32
    %c0_i32_0 = arith.constant 0 : i32
    %c0_i32_1 = arith.constant 0 : i32
    return %c0_i32, %c0_i32_0 : i32, i32
  }
  func.func @transform_4(%arg0: i32) -> (i32, i32) {
    %c0_i32 = arith.constant 0 : i32
    %c0_i32_0 = arith.constant 0 : i32
    %c0_i32_1 = arith.constant 0 : i32
    return %c0_i32, %c0_i32_0 : i32, i32
  }
  func.func @transform_5(%arg0: i32) -> (i32, i32, i32) {
    %c0_i32 = arith.constant 0 : i32
    %c0_i32_0 = arith.constant 0 : i32
    %c0_i32_1 = arith.constant 0 : i32
    return %arg0, %c0_i32, %c0_i32_0 : i32, i32, i32
  }
}

</mosaic_0001>

<llo_original>
// kernel: tpu_custom_call.1
$region0: #{tpu_custom_call.1}
  #allocation0 [shape = 'u32[]', space=smem, size = 0x4, offset = 0x4, fixed_abs, tag = 'smem constant byte address 0x4 - core index']
  #allocation1 [shape = 'u32[144,128]{1,0:T(1,128)}', space=vmem, size = 0x12000, scoped, tag = 'internal scratch']
  %s0 = inlined_call_operand.hbm [shape: f32[4,16,128], index: 0, kind: input, shape index: {}]
  %s1 = inlined_call_operand.hbm [shape: f32[384,128], index: 1, kind: input, shape index: {}]
  %s2 = inlined_call_operand.vmem [shape: f32[1,128], index: 2, kind: input, shape index: {}]
  %s3 = inlined_call_operand.hbm [shape: f32[384,128], index: 3, kind: input, shape index: {}]
  %s4 = inlined_call_operand.vmem [shape: f32[1,128], index: 4, kind: input, shape index: {}]
  %s5 = inlined_call_operand.hbm [shape: f32[4,16,128], index: 5, kind: output, shape index: {}]
  %s6 = sld [smem:[#allocation0]]
  $region65: #{tpu_custom_call.1} parent=0
    _
  %s8 = ssub.s32 1, %s6
  %s9 = scalar_select 0, %s8, %s6
  $region1: #{tpu_custom_call.1} parent=0
    #allocation2 [shape = 'u8[32768]{0}', space=vmem, size = 0x8000, scoped, tag = 'input window, operand 0']
    #allocation3 [shape = 's32[2]{0}', space=sflag, size = 0x8, scoped, tag = 'scoped memory for tpu_custom_call.1']
    #allocation4 [shape = 's32[2]{0}', space=sflag, size = 0x8, scoped, tag = 'scoped memory for tpu_custom_call.1']
    #allocation5 [shape = 'u8[196608]{0}', space=vmem, size = 0x30000, scoped, tag = 'input window, operand 1, single buffered']
    #allocation6 [shape = 's32[1]{0}', space=sflag, size = 0x4, scoped, tag = 'scoped memory for tpu_custom_call.1']
    #allocation7 [shape = 'u8[196608]{0}', space=vmem, size = 0x30000, scoped, tag = 'input window, operand 3, single buffered']
    #allocation8 [shape = 'u8[32768]{0}', space=vmem, size = 0x8000, scoped, tag = 'output window, operand 0']
    %10 = vsyncpa [#allocation3], 0
    %s11 = scalar_lea.sflag [#allocation3], 1
    %12 = vsyncpa %s11, 0
    %13 = vsyncpa [#allocation6], 0
    %14 = vsyncpa [#allocation4], 0
    %s15 = scalar_lea.sflag [#allocation4], 1
    %16 = vsyncpa %s15, 0
    loop: start=0, step=1, limit=4
    $region2: #{tpu_custom_call.1} parent=1 // loop_pre_header
      _
    $region3: #{tpu_custom_call.1} parent=1 // loop_header
      %s18 = sphi 0, %s22
      %p19 = scmp.ge.s32.totalorder %s18, 4
      %s28 = sphi 0, %s30
      %s31 = sphi 0, %s28
      %s32 = sphi 0, %s31
      %s48 = sphi 0, %s32
      %s52 = sphi 0, %s52
      %s54 = sphi 0, %s52
      %s55 = sphi 0, %s54
      %s69 = sphi 0, %s55
      %s73 = sphi 0, %s73
      %s75 = sphi 0, %s73
      %s76 = sphi 0, %s75
      %s90 = sphi 0, %s76
      %s94 = sphi 0, %s94
      %s96 = sphi 0, %s94
      %s97 = sphi 0, %s96
      %s111 = sphi 0, %s97
      %s115 = sphi 0, %s115
      %s117 = sphi 0, %s115
      %s118 = sphi 0, %s117
      %s132 = sphi 0, %s118
      %s138 = sphi 0, %s140
      %s141 = sphi 0, %s138
      %s142 = sphi 0, %s141
      %s158 = sphi 0, %s142
    $region4: #{tpu_custom_call.1} parent=1 // loop_header_branch
      %21 = sbr.rel (%p19) target = $region8
    $region5: #{tpu_custom_call.1} parent=1 // loop_body
      %s23 = ssub.s32 %s18, 1
      %s24 = ssub.s32 %s18, 2
      %s25 = sadd.s32 %s18, 1
      %s26 = ssub.s32 %s18, %s25
      %p27 = scmp.eq.s32.totalorder %s26, 0
      %s29 = sadd.s32 %s28, 1
      %s30 = scalar_select %p27, %s28, %s29
      %p33 = pneg %p27
      %p34 = scmp.eq.s32.totalorder %s18, 1
      %p35 = por %p33, %p34
      %p36 = scmp.ne.s32.totalorder %s28, %s31
      %p37 = scmp.eq.s32.totalorder %s18, 0
      %p38 = por %p36, %p37
      %p39 = scmp.ne.s32.totalorder %s28, %s31
      %p40 = scmp.eq.s32.totalorder %s23, 1
      %p41 = por %p39, %p40
      %p42 = scmp.ne.s32.totalorder %s31, %s32
      %p43 = scmp.eq.s32.totalorder %s23, 0
      %p44 = por %p42, %p43
      %p45 = scmp.ne.s32.totalorder %s31, %s32
      %p46 = scmp.eq.s32.totalorder %s24, 1
      %p47 = por %p45, %p46
      %p49 = scmp.ne.s32.totalorder %s32, %s48
      %p50 = scmp.eq.s32.totalorder %s24, 0
      %p51 = por %p49, %p50
      %s53 = sadd.s32 %s52, 1
      %p56 = scmp.eq.s32.totalorder %s18, 1
      %p57 = scmp.ne.s32.totalorder %s52, %s54
      %p58 = scmp.eq.s32.totalorder %s18, 0
      %p59 = por %p57, %p58
      %p60 = scmp.ne.s32.totalorder %s52, %s54
      %p61 = scmp.eq.s32.totalorder %s23, 1
      %p62 = por %p60, %p61
      %p63 = scmp.ne.s32.totalorder %s54, %s55
      %p64 = scmp.eq.s32.totalorder %s23, 0
      %p65 = por %p63, %p64
      %p66 = scmp.ne.s32.totalorder %s54, %s55
      %p67 = scmp.eq.s32.totalorder %s24, 1
      %p68 = por %p66, %p67
      %p70 = scmp.ne.s32.totalorder %s55, %s69
      %p71 = scmp.eq.s32.totalorder %s24, 0
      %p72 = por %p70, %p71
      %s74 = sadd.s32 %s73, 1
      %p77 = scmp.eq.s32.totalorder %s18, 1
      %p78 = scmp.ne.s32.totalorder %s73, %s75
      %p79 = scmp.eq.s32.totalorder %s18, 0
      %p80 = por %p78, %p79
      %p81 = scmp.ne.s32.totalorder %s73, %s75
      %p82 = scmp.eq.s32.totalorder %s23, 1
      %p83 = por %p81, %p82
      %p84 = scmp.ne.s32.totalorder %s75, %s76
      %p85 = scmp.eq.s32.totalorder %s23, 0
      %p86 = por %p84, %p85
      %p87 = scmp.ne.s32.totalorder %s75, %s76
      %p88 = scmp.eq.s32.totalorder %s24, 1
      %p89 = por %p87, %p88
      %p91 = scmp.ne.s32.totalorder %s76, %s90
      %p92 = scmp.eq.s32.totalorder %s24, 0
      %p93 = por %p91, %p92
      %s95 = sadd.s32 %s94, 1
      %p98 = scmp.eq.s32.totalorder %s18, 1
      %p99 = scmp.ne.s32.totalorder %s94, %s96
      %p100 = scmp.eq.s32.totalorder %s18, 0
      %p101 = por %p99, %p100
      %p102 = scmp.ne.s32.totalorder %s94, %s96
      %p103 = scmp.eq.s32.totalorder %s23, 1
      %p104 = por %p102, %p103
      %p105 = scmp.ne.s32.totalorder %s96, %s97
      %p106 = scmp.eq.s32.totalorder %s23, 0
      %p107 = por %p105, %p106
      %p108 = scmp.ne.s32.totalorder %s96, %s97
      %p109 = scmp.eq.s32.totalorder %s24, 1
      %p110 = por %p108, %p109
      %p112 = scmp.ne.s32.totalorder %s97, %s111
      %p113 = scmp.eq.s32.totalorder %s24, 0
      %p114 = por %p112, %p113
      %s116 = sadd.s32 %s115, 1
      %p119 = scmp.eq.s32.totalorder %s18, 1
      %p120 = scmp.ne.s32.totalorder %s115, %s117
      %p121 = scmp.eq.s32.totalorder %s18, 0
      %p122 = por %p120, %p121
      %p123 = scmp.ne.s32.totalorder %s115, %s117
      %p124 = scmp.eq.s32.totalorder %s23, 1
      %p125 = por %p123, %p124
      %p126 = scmp.ne.s32.totalorder %s117, %s118
      %p127 = scmp.eq.s32.totalorder %s23, 0
      %p128 = por %p126, %p127
      %p129 = scmp.ne.s32.totalorder %s117, %s118
      %p130 = scmp.eq.s32.totalorder %s24, 1
      %p131 = por %p129, %p130
      %p133 = scmp.ne.s32.totalorder %s118, %s132
      %p134 = scmp.eq.s32.totalorder %s24, 0
      %p135 = por %p133, %p134
      %s136 = ssub.s32 %s18, %s25
      %p137 = scmp.eq.s32.totalorder %s136, 0
      %s139 = sadd.s32 %s138, 1
      %s140 = scalar_select %p137, %s138, %s139
      %p143 = pneg %p137
      %p144 = scmp.eq.s32.totalorder %s18, 1
      %p145 = por %p143, %p144
      %p146 = scmp.ne.s32.totalorder %s138, %s141
      %p147 = scmp.eq.s32.totalorder %s18, 0
      %p148 = por %p146, %p147
      %p149 = scmp.ne.s32.totalorder %s138, %s141
      %p150 = scmp.eq.s32.totalorder %s23, 1
      %p151 = por %p149, %p150
      %p152 = scmp.ne.s32.totalorder %s141, %s142
      %p153 = scmp.eq.s32.totalorder %s23, 0
      %p154 = por %p152, %p153
      %p155 = scmp.ne.s32.totalorder %s141, %s142
      %p156 = scmp.eq.s32.totalorder %s24, 1
      %p157 = por %p155, %p156
      %p159 = scmp.ne.s32.totalorder %s142, %s158
      %p160 = scmp.eq.s32.totalorder %s24, 0
      %p161 = por %p159, %p160
      %p162 = scmp.le.s32.totalorder 1, %s18
      %p163 = scmp.lt.s32.totalorder %s18, 3
      %p164 = pnand %p162, %p163
      %p165 = pneg %p164
      // Predicated region
      $region9: #{tpu_custom_call.1} parent=5 // pred_check
        _
      $region10: #{tpu_custom_call.1} parent=5 // pred_check_branch
        %167 = sbr.rel (%p164) target = $region12
      $region11: #{tpu_custom_call.1} parent=5 // pred_region
        %s168 = ssub.s32 %s18, 1
        // Predicated region
        $region13: #{tpu_custom_call.1} parent=11 // pred_check
          %p169 = pneg %p65
        $region14: #{tpu_custom_call.1} parent=11 // pred_check_branch
          %171 = sbr.rel (%p169) target = $region16
        $region15: #{tpu_custom_call.1} parent=11 // pred_region
          %s173 = ssub.s32 6144, 6144
          %174 = vsyncadd [#allocation6], %s173
          %s175 = sshll.u32 [#allocation5], 4
          %s176 = int_to_ptr.vmem [resolvable:$true] %s175
          %181 = dma.hbm_to_vmem [thread:$0]  %s1, 6144, %s176, [#allocation6], 128, 128, 8
        $region16: #{tpu_custom_call.1} parent=11 // pred_fallthru
          _
        // Predicated region
        $region17: #{tpu_custom_call.1} parent=11 // pred_check
          %p182 = pneg %p86
        $region18: #{tpu_custom_call.1} parent=11 // pred_check_branch
          %184 = sbr.rel (%p182) target = $region20
        $region19: #{tpu_custom_call.1} parent=11 // pred_region
          _
        $region20: #{tpu_custom_call.1} parent=11 // pred_fallthru
          _
        // Predicated region
        $region21: #{tpu_custom_call.1} parent=11 // pred_check
          %p185 = pneg %p107
        $region22: #{tpu_custom_call.1} parent=11 // pred_check_branch
          %187 = sbr.rel (%p185) target = $region24
        $region23: #{tpu_custom_call.1} parent=11 // pred_region
          %s189 = ssub.s32 6144, 6144
          %190 = vsyncadd [#allocation6], %s189
          %s191 = sshll.u32 [#allocation7], 4
          %s192 = int_to_ptr.vmem [resolvable:$true] %s191
          %197 = dma.hbm_to_vmem [thread:$0]  %s3, 6144, %s192, [#allocation6], 128, 128, 8
        $region24: #{tpu_custom_call.1} parent=11 // pred_fallthru
          _
        // Predicated region
        $region25: #{tpu_custom_call.1} parent=11 // pred_check
          %p198 = pneg %p128
        $region26: #{tpu_custom_call.1} parent=11 // pred_check_branch
          %200 = sbr.rel (%p198) target = $region28
        $region27: #{tpu_custom_call.1} parent=11 // pred_region
          _
        $region28: #{tpu_custom_call.1} parent=11 // pred_fallthru
          _
      $region12: #{tpu_custom_call.1} parent=5 // pred_fallthru
        _
      %p201 = scmp.lt.s32.totalorder %s18, 2
      // Predicated region
      $region29: #{tpu_custom_call.1} parent=5 // pred_check
        %p202 = pneg %p201
      $region30: #{tpu_custom_call.1} parent=5 // pred_check_branch
        %204 = sbr.rel (%p202) target = $region32
      $region31: #{tpu_custom_call.1} parent=5 // pred_region
        // Predicated region
        $region33: #{tpu_custom_call.1} parent=31 // pred_check
          %p205 = pneg %p38
        $region34: #{tpu_custom_call.1} parent=31 // pred_check_branch
          %207 = sbr.rel (%p205) target = $region36
        $region35: #{tpu_custom_call.1} parent=31 // pred_region
          %s208 = sand.u32 %s28, 1
          %s209 = scalar_lea.sflag [#allocation3], %s208
          %s210 = sand.u32 %s28, 1
          %s211 = smul.addr %s210, 32
          %s212 = scalar_lea.vmem [#allocation2], %s211
          %s213 = smul.u32 2, %s18
          %s215 = ssub.s32 512, 512
          %216 = vsyncadd %s209, %s215
          %s217 = smul.addr %s213, 2
          %s218 = smul.addr %s217, 128
          %s219 = scalar_lea.hbm %s0, %s218
          %s220 = sshll.u32 %s212, 4
          %s221 = int_to_ptr.vmem [resolvable:$true] %s220
          %226 = dma.hbm_to_vmem [thread:$0]  %s219, 512, %s221, %s209, 128, 128, 8
        $region36: #{tpu_custom_call.1} parent=31 // pred_fallthru
          _
      $region32: #{tpu_custom_call.1} parent=5 // pred_fallthru
        _
      %p227 = scmp.le.s32.totalorder 1, %s18
      %p228 = scmp.lt.s32.totalorder %s18, 3
      %p229 = pnand %p227, %p228
      %p230 = pneg %p229
      // Predicated region
      $region37: #{tpu_custom_call.1} parent=5 // pred_check
        _
      $region38: #{tpu_custom_call.1} parent=5 // pred_check_branch
        %232 = sbr.rel (%p229) target = $region40
      $region39: #{tpu_custom_call.1} parent=5 // pred_region
        %s233 = ssub.s32 %s18, 1
        %s234 = sand.u32 %s31, 1
        %s235 = scalar_lea.sflag [#allocation3], %s234
        %s236 = sand.u32 %s31, 1
        %s237 = smul.addr %s236, 32
        %s238 = scalar_lea.vmem [#allocation2], %s237
        // Predicated region
        $region41: #{tpu_custom_call.1} parent=39 // pred_check
          %p239 = pneg %p44
        $region42: #{tpu_custom_call.1} parent=39 // pred_check_branch
          %241 = sbr.rel (%p239) target = $region44
        $region43: #{tpu_custom_call.1} parent=39 // pred_region
          %242 = dma.done %s235, 512
        $region44: #{tpu_custom_call.1} parent=39 // pred_fallthru
          _
        // Predicated region
        $region45: #{tpu_custom_call.1} parent=39 // pred_check
          %p243 = pneg %p65
        $region46: #{tpu_custom_call.1} parent=39 // pred_check_branch
          %245 = sbr.rel (%p243) target = $region48
        $region47: #{tpu_custom_call.1} parent=39 // pred_region
          %246 = dma.done [#allocation6], 6144
        $region48: #{tpu_custom_call.1} parent=39 // pred_fallthru
          _
        // Predicated region
        $region49: #{tpu_custom_call.1} parent=39 // pred_check
          %p247 = pneg %p107
        $region50: #{tpu_custom_call.1} parent=39 // pred_check_branch
          %249 = sbr.rel (%p247) target = $region52
        $region51: #{tpu_custom_call.1} parent=39 // pred_region
          %250 = dma.done [#allocation6], 6144
        $region52: #{tpu_custom_call.1} parent=39 // pred_fallthru
          _
        %s251 = sand.u32 %s31, 1
        %s252 = scalar_lea.sflag [#allocation3], %s251
        %s253 = sand.u32 %s31, 1
        %s254 = smul.addr %s253, 32
        %s255 = scalar_lea.vmem [#allocation2], %s254
        %p256 = pneg %p44
        %p257 = pneg %p41
        %p258 = pneg %p65
        %p259 = pneg %p62
        %p260 = pneg %p86
        %p261 = pneg %p83
        %p262 = pneg %p107
        %p263 = pneg %p104
        %p264 = pneg %p128
        %p265 = pneg %p125
        %p266 = pneg %p154
        %p267 = pneg %p151
        %s268 = sand.u32 %s141, 1
        %s269 = scalar_lea.sflag [#allocation4], %s268
        %s270 = sand.u32 %s141, 1
        %s271 = smul.addr %s270, 32
        %s272 = scalar_lea.vmem [#allocation8], %s271
        %s273 = smul.u32 2, %s23
        %s274 = smul.u32 2, %s23
        %v275 = vld [vmem:[%s238] sm:$0xff]
        %v276 = vld [vmem:[%s238 + $0x8] sm:$0xff]
        %v277 = vld [vmem:[%s238 + $0x10] sm:$0xff]
        %v278 = vld [vmem:[%s238 + $0x18] sm:$0xff]
        %v279 = vlaneseq
        %v280 = vshrl.u32 %v279, 7
        %v281 = vadd.s32 %v280, 8
        %v282 = vadd.s32 %v280, 16
        %v283 = vadd.s32 %v280, 24
        %vm284 = vcmp.lt.s32.totalorder %v280, 0
        %v285 = vsub.s32 0, %v280
        %v286 = vsel %vm284, %v285, %v280
        %v287 = vshrl.u32 %v286, 4
        %v288 = vand.u32 %v286, 15
        %v289 = vsub.s32 0, %v288
        %v290 = vsel %vm284, %v289, %v288
        %vm291 = vcmp.lt.s32.totalorder %v281, 0
        %v292 = vsub.s32 0, %v281
        %v293 = vsel %vm291, %v292, %v281
        %v294 = vshrl.u32 %v293, 4
        %v295 = vand.u32 %v293, 15
        %v296 = vsub.s32 0, %v295
        %v297 = vsel %vm291, %v296, %v295
        %vm298 = vcmp.lt.s32.totalorder %v282, 0
        %v299 = vsub.s32 0, %v282
        %v300 = vsel %vm298, %v299, %v282
        %v301 = vshrl.u32 %v300, 4
        %v302 = vand.u32 %v300, 15
        %v303 = vsub.s32 0, %v302
        %v304 = vsel %vm298, %v303, %v302
        %vm305 = vcmp.lt.s32.totalorder %v283, 0
        %v306 = vsub.s32 0, %v283
        %v307 = vsel %vm305, %v306, %v283
        %v308 = vshrl.u32 %v307, 4
        %v309 = vand.u32 %v307, 15
        %v310 = vsub.s32 0, %v309
        %v311 = vsel %vm305, %v310, %v309
        %vm312 = vcmp.ne.s32.totalorder %v290, 0
        %vm313 = vcmp.ne.s32.totalorder %v297, 0
        %vm314 = vcmp.ne.s32.totalorder %v304, 0
        %vm315 = vcmp.ne.s32.totalorder %v311, 0
        %vm316 = vcmp.lt.s32.totalorder %v290, 0
        %vm317 = vcmp.lt.s32.totalorder %v297, 0
        %vm318 = vcmp.lt.s32.totalorder %v304, 0
        %vm319 = vcmp.lt.s32.totalorder %v311, 0
        %vm320 = vmand %vm316, %vm312
        %vm321 = vmand %vm317, %vm313
        %vm322 = vmand %vm318, %vm314
        %vm323 = vmand %vm319, %vm315
        %v324 = vadd.s32 %v290, 16
        %v325 = vadd.s32 %v297, 16
        %v326 = vadd.s32 %v304, 16
        %v327 = vadd.s32 %v311, 16
        %v328 = vsel %vm320, %v324, %v290
        %v329 = vsel %vm321, %v325, %v297
        %v330 = vsel %vm322, %v326, %v304
        %v331 = vsel %vm323, %v327, %v311
        %vm332 = vcmp.ne.s32.totalorder %v328, 0
        %vm333 = vcmp.ne.s32.totalorder %v329, 0
        %vm334 = vcmp.ne.s32.totalorder %v330, 0
        %vm335 = vcmp.ne.s32.totalorder %v331, 0
        %vm336 = vcmp.ne.s32.totalorder %v328, 15
        %vm337 = vcmp.ne.s32.totalorder %v329, 15
        %vm338 = vcmp.ne.s32.totalorder %v330, 15
        %vm339 = vcmp.ne.s32.totalorder %v331, 15
        %v340 = vrot.slane %v275, 7
        %v341 = vrot.slane %v276, 7
        %v342 = vrot.slane %v277, 7
        %v343 = vrot.slane %v278, 7
        %vm344 = vcmp.lt.s32.totalorder %v280, 1
        %v345 = vsel %vm344, %v342, %v343
        %v346 = vsel %vm344, %v341, %v342
        %v347 = vsel %vm344, %v340, %v341
        %v348 = vsel %vm344, %v343, %v340
        %v349 = vsel %vm332, 1, 0
        %v350 = vsel %vm333, 1, 0
        %v351 = vsel %vm334, 1, 0
        %v352 = vsel %vm335, 1, 0
        %vm353 = vcmp.eq.s32.totalorder %v349, 1
        %vm354 = vcmp.eq.s32.totalorder %v350, 1
        %vm355 = vcmp.eq.s32.totalorder %v351, 1
        %vm356 = vcmp.eq.s32.totalorder %v352, 1
        %v357 = vsel %vm353, %v348, 0.0
        %v358 = vsel %vm354, %v347, 0.0
        %v359 = vsel %vm355, %v346, 0.0
        %v360 = vsel %vm356, %v345, 0.0
        %v361 = vrot.slane %v275, 1
        %v362 = vrot.slane %v276, 1
        %v363 = vrot.slane %v277, 1
        %v364 = vrot.slane %v278, 1
        %vm365 = vcmp.lt.s32.totalorder %v280, 7
        %v366 = vsel %vm365, %v363, %v364
        %v367 = vsel %vm365, %v362, %v363
        %v368 = vsel %vm365, %v361, %v362
        %v369 = vsel %vm365, %v364, %v361
        %v370 = vsel %vm336, 1, 0
        %v371 = vsel %vm337, 1, 0
        %v372 = vsel %vm338, 1, 0
        %v373 = vsel %vm339, 1, 0
        %vm374 = vcmp.eq.s32.totalorder %v370, 1
        %vm375 = vcmp.eq.s32.totalorder %v371, 1
        %vm376 = vcmp.eq.s32.totalorder %v372, 1
        %vm377 = vcmp.eq.s32.totalorder %v373, 1
        %v378 = vsel %vm374, %v368, 0.0
        %v379 = vsel %vm375, %v367, 0.0
        %v380 = vsel %vm376, %v366, 0.0
        %v381 = vsel %vm377, %v369, 0.0
        %v382 = vld [vmem:[#allocation5] sm:$0xff]
        %v383 = vld [vmem:[#allocation5 + $0x8] sm:$0xff]
        %v384 = vld [vmem:[#allocation5 + $0x10] sm:$0xff]
        %v385 = vld [vmem:[#allocation5 + $0x18] sm:$0xff]
        %v386 = vld [vmem:[#allocation5 + $0x20] sm:$0xff]
        %v387 = vld [vmem:[#allocation5 + $0x28] sm:$0xff]
        %v388 = vld [vmem:[#allocation5 + $0x30] sm:$0xff]
        %v389 = vld [vmem:[#allocation5 + $0x38] sm:$0xff]
        %v390 = vld [vmem:[#allocation5 + $0x40] sm:$0xff]
        %v391 = vld [vmem:[#allocation5 + $0x48] sm:$0xff]
        %v392 = vld [vmem:[#allocation5 + $0x50] sm:$0xff]
        %v393 = vld [vmem:[#allocation5 + $0x58] sm:$0xff]
        %v394 = vld [vmem:[#allocation5 + $0x60] sm:$0xff]
        %v395 = vld [vmem:[#allocation5 + $0x68] sm:$0xff]
        %v396 = vld [vmem:[#allocation5 + $0x70] sm:$0xff]
        %v397 = vld [vmem:[#allocation5 + $0x78] sm:$0xff]
        %v398 = vld [vmem:[#allocation5 + $0x80] sm:$0xff]
        %v399 = vld [vmem:[#allocation5 + $0x88] sm:$0xff]
        %v400 = vld [vmem:[#allocation5 + $0x90] sm:$0xff]
        %v401 = vld [vmem:[#allocation5 + $0x98] sm:$0xff]
        %v402 = vld [vmem:[#allocation5 + $0xa0] sm:$0xff]
        %v403 = vld [vmem:[#allocation5 + $0xa8] sm:$0xff]
        %v404 = vld [vmem:[#allocation5 + $0xb0] sm:$0xff]
        %v405 = vld [vmem:[#allocation5 + $0xb8] sm:$0xff]
        %v406 = vld [vmem:[#allocation5 + $0xc0] sm:$0xff]
        %v407 = vld [vmem:[#allocation5 + $0xc8] sm:$0xff]
        %v408 = vld [vmem:[#allocation5 + $0xd0] sm:$0xff]
        %v409 = vld [vmem:[#allocation5 + $0xd8] sm:$0xff]
        %v410 = vld [vmem:[#allocation5 + $0xe0] sm:$0xff]
        %v411 = vld [vmem:[#allocation5 + $0xe8] sm:$0xff]
        %v412 = vld [vmem:[#allocation5 + $0xf0] sm:$0xff]
        %v413 = vld [vmem:[#allocation5 + $0xf8] sm:$0xff]
        %v414 = vld [vmem:[#allocation5 + $0x100] sm:$0xff]
        %v415 = vld [vmem:[#allocation5 + $0x108] sm:$0xff]
        %v416 = vld [vmem:[#allocation5 + $0x110] sm:$0xff]
        %v417 = vld [vmem:[#allocation5 + $0x118] sm:$0xff]
        %v418 = vld [vmem:[#allocation5 + $0x120] sm:$0xff]
        %v419 = vld [vmem:[#allocation5 + $0x128] sm:$0xff]
        %v420 = vld [vmem:[#allocation5 + $0x130] sm:$0xff]
        %v421 = vld [vmem:[#allocation5 + $0x138] sm:$0xff]
        %v422 = vld [vmem:[#allocation5 + $0x140] sm:$0xff]
        %v423 = vld [vmem:[#allocation5 + $0x148] sm:$0xff]
        %v424 = vld [vmem:[#allocation5 + $0x150] sm:$0xff]
        %v425 = vld [vmem:[#allocation5 + $0x158] sm:$0xff]
        %v426 = vld [vmem:[#allocation5 + $0x160] sm:$0xff]
        %v427 = vld [vmem:[#allocation5 + $0x168] sm:$0xff]
        %v428 = vld [vmem:[#allocation5 + $0x170] sm:$0xff]
        %v429 = vld [vmem:[#allocation5 + $0x178] sm:$0xff]
        %v430 = vld [vmem:[%s2] sm:$0x1]
        %v432 = vlaneseq
        %v433 = vshrl.u32 %v432, 7
        %v434 = vsub.s32 0, %v433
        %v435 = vrot.slane %v430, %v434
        %437 = vmatprep.subr.mxu0 0.0
        %438 = vmatpush1.msra.mxu0 %v382
        %439 = vmatprep.subr.mxu0 0.0
        %440 = vmatpush1.msra.mxu0 %v383
        %441 = vmatprep.subr.mxu0 0.0
        %442 = vmatpush1.msra.mxu0 %v384
        %443 = vmatprep.subr.mxu0 0.0
        %444 = vmatpush1.msra.mxu0 %v385
        %445 = vmatprep.subr.mxu0 0.0
        %446 = vmatpush1.msra.mxu0 %v386
        %447 = vmatprep.subr.mxu0 0.0
        %448 = vmatpush1.msra.mxu0 %v387
        %449 = vmatprep.subr.mxu0 0.0
        %450 = vmatpush1.msra.mxu0 %v388
        %451 = vmatprep.subr.mxu0 0.0
        %452 = vmatpush1.msra.mxu0 %v389
        %453 = vmatprep.subr.mxu0 0.0
        %454 = vmatpush1.msra.mxu0 %v390
        %455 = vmatprep.subr.mxu0 0.0
        %456 = vmatpush1.msra.mxu0 %v391
        %457 = vmatprep.subr.mxu0 0.0
        %458 = vmatpush1.msra.mxu0 %v392
        %459 = vmatprep.subr.mxu0 0.0
        %460 = vmatpush1.msra.mxu0 %v393
        %461 = vmatprep.subr.mxu0 0.0
        %462 = vmatpush1.msra.mxu0 %v394
        %463 = vmatprep.subr.mxu0 0.0
        %464 = vmatpush1.msra.mxu0 %v395
        %465 = vmatprep.subr.mxu0 0.0
        %466 = vmatpush1.msra.mxu0 %v396
        %467 = vmatprep.subr.mxu0 0.0
        %468 = vmatpush1.msra.mxu0 %v397
        %469 = vmatprep.subr.mxu0 0.0
        %470 = vmatpush1.msra.mxu0 %v398
        %471 = vmatprep.subr.mxu0 0.0
        %472 = vmatpush1.msra.mxu0 %v399
        %473 = vmatprep.subr.mxu0 0.0
        %474 = vmatpush1.msra.mxu0 %v400
        %475 = vmatprep.subr.mxu0 0.0
        %476 = vmatpush1.msra.mxu0 %v401
        %477 = vmatprep.subr.mxu0 0.0
        %478 = vmatpush1.msra.mxu0 %v402
        %479 = vmatprep.subr.mxu0 0.0
        %480 = vmatpush1.msra.mxu0 %v403
        %481 = vmatprep.subr.mxu0 0.0
        %482 = vmatpush1.msra.mxu0 %v404
        %483 = vmatprep.subr.mxu0 0.0
        %484 = vmatpush1.msra.mxu0 %v405
        %485 = vmatprep.subr.mxu0 0.0
        %486 = vmatpush1.msra.mxu0 %v406
        %487 = vmatprep.subr.mxu0 0.0
        %488 = vmatpush1.msra.mxu0 %v407
        %489 = vmatprep.subr.mxu0 0.0
        %490 = vmatpush1.msra.mxu0 %v408
        %491 = vmatprep.subr.mxu0 0.0
        %492 = vmatpush1.msra.mxu0 %v409
        %493 = vmatprep.subr.mxu0 0.0
        %494 = vmatpush1.msra.mxu0 %v410
        %495 = vmatprep.subr.mxu0 0.0
        %496 = vmatpush1.msra.mxu0 %v411
        %497 = vmatprep.subr.mxu0 0.0
        %498 = vmatpush1.msra.mxu0 %v412
        %499 = vmatprep.subr.mxu0 0.0
        %500 = vmatpush1.msra.mxu0 %v413
        %501 = vmatprep.mubr.f32.mxu0 %v275
        %502 = vmatmul.mubr.f32.gmra.mrb[0].mxu0 %v357
        %v503 = vpop.f32.mrb[0].mxu0
        %v504 = vadd.f32 %v435, %v503
        %v505 = vpop.f32.mrb[0].mxu0
        %506 = vmatprep.mubr.f32.mxu0 %v276
        %507 = vmatmul.mubr.f32.gmra.mrb[0].mxu0 %v358
        %v508 = vpop.f32.mrb[0].mxu0
        %v509 = vadd.f32 %v435, %v508
        %v510 = vpop.f32.mrb[0].mxu0
        %511 = vmatprep.mubr.f32.mxu0 %v277
        %512 = vmatmul.mubr.f32.gmra.mrb[0].mxu0 %v359
        %v513 = vpop.f32.mrb[0].mxu0
        %v514 = vadd.f32 %v435, %v513
        %v515 = vpop.f32.mrb[0].mxu0
        %516 = vmatprep.mubr.f32.mxu0 %v278
        %517 = vmatmul.mubr.f32.gmra.mrb[0].mxu0 %v360
        %v518 = vpop.f32.mrb[0].mxu0
        %v519 = vadd.f32 %v435, %v518
        %v520 = vpop.f32.mrb[0].mxu0
        %521 = vdwg.mxu0
        %522 = vmatprep.subr.mxu0 0.0
        %523 = vmatpush1.msra.mxu0 %v414
        %524 = vmatprep.subr.mxu0 0.0
        %525 = vmatpush1.msra.mxu0 %v415
        %526 = vmatprep.subr.mxu0 0.0
        %527 = vmatpush1.msra.mxu0 %v416
        %528 = vmatprep.subr.mxu0 0.0
        %529 = vmatpush1.msra.mxu0 %v417
        %530 = vmatprep.subr.mxu0 0.0
        %531 = vmatpush1.msra.mxu0 %v418
        %532 = vmatprep.subr.mxu0 0.0
        %533 = vmatpush1.msra.mxu0 %v419
        %534 = vmatprep.subr.mxu0 0.0
        %535 = vmatpush1.msra.mxu0 %v420
        %536 = vmatprep.subr.mxu0 0.0
        %537 = vmatpush1.msra.mxu0 %v421
        %538 = vmatprep.subr.mxu0 0.0
        %539 = vmatpush1.msra.mxu0 %v422
        %540 = vmatprep.subr.mxu0 0.0
        %541 = vmatpush1.msra.mxu0 %v423
        %542 = vmatprep.subr.mxu0 0.0
        %543 = vmatpush1.msra.mxu0 %v424
        %544 = vmatprep.subr.mxu0 0.0
        %545 = vmatpush1.msra.mxu0 %v425
        %546 = vmatprep.subr.mxu0 0.0
        %547 = vmatpush1.msra.mxu0 %v426
        %548 = vmatprep.subr.mxu0 0.0
        %549 = vmatpush1.msra.mxu0 %v427
        %550 = vmatprep.subr.mxu0 0.0
        %551 = vmatpush1.msra.mxu0 %v428
        %552 = vmatprep.subr.mxu0 0.0
        %553 = vmatpush1.msra.mxu0 %v429
        %554 = vmatprep.subr.mxu0 0.0
        %555 = vmatpush1.msra.mxu0 0.0
        %556 = vmatprep.subr.mxu0 0.0
        %557 = vmatpush1.msra.mxu0 0.0
        %558 = vmatprep.subr.mxu0 0.0
        %559 = vmatpush1.msra.mxu0 0.0
        %560 = vmatprep.subr.mxu0 0.0
        %561 = vmatpush1.msra.mxu0 0.0
        %562 = vmatprep.subr.mxu0 0.0
        %563 = vmatpush1.msra.mxu0 0.0
        %564 = vmatprep.subr.mxu0 0.0
        %565 = vmatpush1.msra.mxu0 0.0
        %566 = vmatprep.subr.mxu0 0.0
        %567 = vmatpush1.msra.mxu0 0.0
        %568 = vmatprep.subr.mxu0 0.0
        %569 = vmatpush1.msra.mxu0 0.0
        %570 = vmatprep.subr.mxu0 0.0
        %571 = vmatpush1.msra.mxu0 0.0
        %572 = vmatprep.subr.mxu0 0.0
        %573 = vmatpush1.msra.mxu0 0.0
        %574 = vmatprep.subr.mxu0 0.0
        %575 = vmatpush1.msra.mxu0 0.0
        %576 = vmatprep.subr.mxu0 0.0
        %577 = vmatpush1.msra.mxu0 0.0
        %578 = vmatprep.subr.mxu0 0.0
        %579 = vmatpush1.msra.mxu0 0.0
        %580 = vmatprep.subr.mxu0 0.0
        %581 = vmatpush1.msra.mxu0 0.0
        %582 = vmatprep.subr.mxu0 0.0
        %583 = vmatpush1.msra.mxu0 0.0
        %584 = vmatprep.subr.mxu0 0.0
        %585 = vmatpush1.msra.mxu0 0.0
        %586 = vmatprep.mubr.f32.mxu0 0.0
        %587 = vmatmul.mubr.f32.gmra.mrb[0].mxu0 %v378
        %v588 = vpop.f32.mrb[0].mxu0
        %v589 = vadd.f32 %v504, %v588
        %v590 = vpop.f32.mrb[0].mxu0
        %591 = vmatprep.mubr.f32.mxu0 0.0
        %592 = vmatmul.mubr.f32.gmra.mrb[0].mxu0 %v379
        %v593 = vpop.f32.mrb[0].mxu0
        %v594 = vadd.f32 %v509, %v593
        %v595 = vpop.f32.mrb[0].mxu0
        %596 = vmatprep.mubr.f32.mxu0 0.0
        %597 = vmatmul.mubr.f32.gmra.mrb[0].mxu0 %v380
        %v598 = vpop.f32.mrb[0].mxu0
        %v599 = vadd.f32 %v514, %v598
        %v600 = vpop.f32.mrb[0].mxu0
        %601 = vmatprep.mubr.f32.mxu0 0.0
        %602 = vmatmul.mubr.f32.gmra.mrb[0].mxu0 %v381
        %v603 = vpop.f32.mrb[0].mxu0
        %v604 = vadd.f32 %v519, %v603
        %v605 = vpop.f32.mrb[0].mxu0
        %606 = vdwg.mxu0
        %v607 = vmax.f32 %v589, 0.0
        %v608 = vmax.f32 %v594, 0.0
        %v609 = vmax.f32 %v599, 0.0
        %v610 = vmax.f32 %v604, 0.0
        %v611 = vrot.slane %v607, 7
        %v612 = vrot.slane %v608, 7
        %v613 = vrot.slane %v609, 7
        %v614 = vrot.slane %v610, 7
        %v615 = vsel %vm344, %v613, %v614
        %v616 = vsel %vm344, %v612, %v613
        %v617 = vsel %vm344, %v611, %v612
        %v618 = vsel %vm344, %v614, %v611
        %v619 = vsel %vm353, %v618, 0.0
        %v620 = vsel %vm354, %v617, 0.0
        %v621 = vsel %vm355, %v616, 0.0
        %v622 = vsel %vm356, %v615, 0.0
        %v623 = vrot.slane %v607, 1
        %v624 = vrot.slane %v608, 1
        %v625 = vrot.slane %v609, 1
        %v626 = vrot.slane %v610, 1
        %v627 = vsel %vm365, %v625, %v626
        %v628 = vsel %vm365, %v624, %v625
        %v629 = vsel %vm365, %v623, %v624
        %v630 = vsel %vm365, %v626, %v623
        %v631 = vsel %vm374, %v629, 0.0
        %v632 = vsel %vm375, %v628, 0.0
        %v633 = vsel %vm376, %v627, 0.0
        %v634 = vsel %vm377, %v630, 0.0
        %v635 = vld [vmem:[#allocation7] sm:$0xff]
        %v636 = vld [vmem:[#allocation7 + $0x8] sm:$0xff]
        %v637 = vld [vmem:[#allocation7 + $0x10] sm:$0xff]
        %v638 = vld [vmem:[#allocation7 + $0x18] sm:$0xff]
        %v639 = vld [vmem:[#allocation7 + $0x20] sm:$0xff]
        %v640 = vld [vmem:[#allocation7 + $0x28] sm:$0xff]
        %v641 = vld [vmem:[#allocation7 + $0x30] sm:$0xff]
        %v642 = vld [vmem:[#allocation7 + $0x38] sm:$0xff]
        %v643 = vld [vmem:[#allocation7 + $0x40] sm:$0xff]
        %v644 = vld [vmem:[#allocation7 + $0x48] sm:$0xff]
        %v645 = vld [vmem:[#allocation7 + $0x50] sm:$0xff]
        %v646 = vld [vmem:[#allocation7 + $0x58] sm:$0xff]
        %v647 = vld [vmem:[#allocation7 + $0x60] sm:$0xff]
        %v648 = vld [vmem:[#allocation7 + $0x68] sm:$0xff]
        %v649 = vld [vmem:[#allocation7 + $0x70] sm:$0xff]
        %v650 = vld [vmem:[#allocation7 + $0x78] sm:$0xff]
        %v651 = vld [vmem:[#allocation7 + $0x80] sm:$0xff]
        %v652 = vld [vmem:[#allocation7 + $0x88] sm:$0xff]
        %v653 = vld [vmem:[#allocation7 + $0x90] sm:$0xff]
        %v654 = vld [vmem:[#allocation7 + $0x98] sm:$0xff]
        %v655 = vld [vmem:[#allocation7 + $0xa0] sm:$0xff]
        %v656 = vld [vmem:[#allocation7 + $0xa8] sm:$0xff]
        %v657 = vld [vmem:[#allocation7 + $0xb0] sm:$0xff]
        %v658 = vld [vmem:[#allocation7 + $0xb8] sm:$0xff]
        %v659 = vld [vmem:[#allocation7 + $0xc0] sm:$0xff]
        %v660 = vld [vmem:[#allocation7 + $0xc8] sm:$0xff]
        %v661 = vld [vmem:[#allocation7 + $0xd0] sm:$0xff]
        %v662 = vld [vmem:[#allocation7 + $0xd8] sm:$0xff]
        %v663 = vld [vmem:[#allocation7 + $0xe0] sm:$0xff]
        %v664 = vld [vmem:[#allocation7 + $0xe8] sm:$0xff]
        %v665 = vld [vmem:[#allocation7 + $0xf0] sm:$0xff]
        %v666 = vld [vmem:[#allocation7 + $0xf8] sm:$0xff]
        %v667 = vld [vmem:[#allocation7 + $0x100] sm:$0xff]
        %v668 = vld [vmem:[#allocation7 + $0x108] sm:$0xff]
        %v669 = vld [vmem:[#allocation7 + $0x110] sm:$0xff]
        %v670 = vld [vmem:[#allocation7 + $0x118] sm:$0xff]
        %v671 = vld [vmem:[#allocation7 + $0x120] sm:$0xff]
        %v672 = vld [vmem:[#allocation7 + $0x128] sm:$0xff]
        %v673 = vld [vmem:[#allocation7 + $0x130] sm:$0xff]
        %v674 = vld [vmem:[#allocation7 + $0x138] sm:$0xff]
        %v675 = vld [vmem:[#allocation7 + $0x140] sm:$0xff]
        %v676 = vld [vmem:[#allocation7 + $0x148] sm:$0xff]
        %v677 = vld [vmem:[#allocation7 + $0x150] sm:$0xff]
        %v678 = vld [vmem:[#allocation7 + $0x158] sm:$0xff]
        %v679 = vld [vmem:[#allocation7 + $0x160] sm:$0xff]
        %v680 = vld [vmem:[#allocation7 + $0x168] sm:$0xff]
        %v681 = vld [vmem:[#allocation7 + $0x170] sm:$0xff]
        %v682 = vld [vmem:[#allocation7 + $0x178] sm:$0xff]
        %v683 = vld [vmem:[%s4] sm:$0x1]
        %v685 = vlaneseq
        %v686 = vshrl.u32 %v685, 7
        %v687 = vsub.s32 0, %v686
        %v688 = vrot.slane %v683, %v687
        %690 = vmatprep.subr.mxu0 0.0
        %691 = vmatpush1.msra.mxu0 %v635
        %692 = vmatprep.subr.mxu0 0.0
        %693 = vmatpush1.msra.mxu0 %v636
        %694 = vmatprep.subr.mxu0 0.0
        %695 = vmatpush1.msra.mxu0 %v637
        %696 = vmatprep.subr.mxu0 0.0
        %697 = vmatpush1.msra.mxu0 %v638
        %698 = vmatprep.subr.mxu0 0.0
        %699 = vmatpush1.msra.mxu0 %v639
        %700 = vmatprep.subr.mxu0 0.0
        %701 = vmatpush1.msra.mxu0 %v640
        %702 = vmatprep.subr.mxu0 0.0
        %703 = vmatpush1.msra.mxu0 %v641
        %704 = vmatprep.subr.mxu0 0.0
        %705 = vmatpush1.msra.mxu0 %v642
        %706 = vmatprep.subr.mxu0 0.0
        %707 = vmatpush1.msra.mxu0 %v643
        %708 = vmatprep.subr.mxu0 0.0
        %709 = vmatpush1.msra.mxu0 %v644
        %710 = vmatprep.subr.mxu0 0.0
        %711 = vmatpush1.msra.mxu0 %v645
        %712 = vmatprep.subr.mxu0 0.0
        %713 = vmatpush1.msra.mxu0 %v646
        %714 = vmatprep.subr.mxu0 0.0
        %715 = vmatpush1.msra.mxu0 %v647
        %716 = vmatprep.subr.mxu0 0.0
        %717 = vmatpush1.msra.mxu0 %v648
        %718 = vmatprep.subr.mxu0 0.0
        %719 = vmatpush1.msra.mxu0 %v649
        %720 = vmatprep.subr.mxu0 0.0
        %721 = vmatpush1.msra.mxu0 %v650
        %722 = vmatprep.subr.mxu0 0.0
        %723 = vmatpush1.msra.mxu0 %v651
        %724 = vmatprep.subr.mxu0 0.0
        %725 = vmatpush1.msra.mxu0 %v652
        %726 = vmatprep.subr.mxu0 0.0
        %727 = vmatpush1.msra.mxu0 %v653
        %728 = vmatprep.subr.mxu0 0.0
        %729 = vmatpush1.msra.mxu0 %v654
        %730 = vmatprep.subr.mxu0 0.0
        %731 = vmatpush1.msra.mxu0 %v655
        %732 = vmatprep.subr.mxu0 0.0
        %733 = vmatpush1.msra.mxu0 %v656
        %734 = vmatprep.subr.mxu0 0.0
        %735 = vmatpush1.msra.mxu0 %v657
        %736 = vmatprep.subr.mxu0 0.0
        %737 = vmatpush1.msra.mxu0 %v658
        %738 = vmatprep.subr.mxu0 0.0
        %739 = vmatpush1.msra.mxu0 %v659
        %740 = vmatprep.subr.mxu0 0.0
        %741 = vmatpush1.msra.mxu0 %v660
        %742 = vmatprep.subr.mxu0 0.0
        %743 = vmatpush1.msra.mxu0 %v661
        %744 = vmatprep.subr.mxu0 0.0
        %745 = vmatpush1.msra.mxu0 %v662
        %746 = vmatprep.subr.mxu0 0.0
        %747 = vmatpush1.msra.mxu0 %v663
        %748 = vmatprep.subr.mxu0 0.0
        %749 = vmatpush1.msra.mxu0 %v664
        %750 = vmatprep.subr.mxu0 0.0
        %751 = vmatpush1.msra.mxu0 %v665
        %752 = vmatprep.subr.mxu0 0.0
        %753 = vmatpush1.msra.mxu0 %v666
        %754 = vmatprep.mubr.f32.mxu0 %v607
        %755 = vmatmul.mubr.f32.gmra.mrb[0].mxu0 %v619
        %v756 = vpop.f32.mrb[0].mxu0
        %v757 = vadd.f32 %v688, %v756
        %v758 = vpop.f32.mrb[0].mxu0
        %759 = vmatprep.mubr.f32.mxu0 %v608
        %760 = vmatmul.mubr.f32.gmra.mrb[0].mxu0 %v620
        %v761 = vpop.f32.mrb[0].mxu0
        %v762 = vadd.f32 %v688, %v761
        %v763 = vpop.f32.mrb[0].mxu0
        %764 = vmatprep.mubr.f32.mxu0 %v609
        %765 = vmatmul.mubr.f32.gmra.mrb[0].mxu0 %v621
        %v766 = vpop.f32.mrb[0].mxu0
        %v767 = vadd.f32 %v688, %v766
        %v768 = vpop.f32.mrb[0].mxu0
        %769 = vmatprep.mubr.f32.mxu0 %v610
        %770 = vmatmul.mubr.f32.gmra.mrb[0].mxu0 %v622
        %v771 = vpop.f32.mrb[0].mxu0
        %v772 = vadd.f32 %v688, %v771
        %v773 = vpop.f32.mrb[0].mxu0
        %774 = vdwg.mxu0
        %775 = vmatprep.subr.mxu0 0.0
        %776 = vmatpush1.msra.mxu0 %v667
        %777 = vmatprep.subr.mxu0 0.0
        %778 = vmatpush1.msra.mxu0 %v668
        %779 = vmatprep.subr.mxu0 0.0
        %780 = vmatpush1.msra.mxu0 %v669
        %781 = vmatprep.subr.mxu0 0.0
        %782 = vmatpush1.msra.mxu0 %v670
        %783 = vmatprep.subr.mxu0 0.0
        %784 = vmatpush1.msra.mxu0 %v671
        %785 = vmatprep.subr.mxu0 0.0
        %786 = vmatpush1.msra.mxu0 %v672
        %787 = vmatprep.subr.mxu0 0.0
        %788 = vmatpush1.msra.mxu0 %v673
        %789 = vmatprep.subr.mxu0 0.0
        %790 = vmatpush1.msra.mxu0 %v674
        %791 = vmatprep.subr.mxu0 0.0
        %792 = vmatpush1.msra.mxu0 %v675
        %793 = vmatprep.subr.mxu0 0.0
        %794 = vmatpush1.msra.mxu0 %v676
        %795 = vmatprep.subr.mxu0 0.0
        %796 = vmatpush1.msra.mxu0 %v677
        %797 = vmatprep.subr.mxu0 0.0
        %798 = vmatpush1.msra.mxu0 %v678
        %799 = vmatprep.subr.mxu0 0.0
        %800 = vmatpush1.msra.mxu0 %v679
        %801 = vmatprep.subr.mxu0 0.0
        %802 = vmatpush1.msra.mxu0 %v680
        %803 = vmatprep.subr.mxu0 0.0
        %804 = vmatpush1.msra.mxu0 %v681
        %805 = vmatprep.subr.mxu0 0.0
        %806 = vmatpush1.msra.mxu0 %v682
        %807 = vmatprep.subr.mxu0 0.0
        %808 = vmatpush1.msra.mxu0 0.0
        %809 = vmatprep.subr.mxu0 0.0
        %810 = vmatpush1.msra.mxu0 0.0
        %811 = vmatprep.subr.mxu0 0.0
        %812 = vmatpush1.msra.mxu0 0.0
        %813 = vmatprep.subr.mxu0 0.0
        %814 = vmatpush1.msra.mxu0 0.0
        %815 = vmatprep.subr.mxu0 0.0
        %816 = vmatpush1.msra.mxu0 0.0
        %817 = vmatprep.subr.mxu0 0.0
        %818 = vmatpush1.msra.mxu0 0.0
        %819 = vmatprep.subr.mxu0 0.0
        %820 = vmatpush1.msra.mxu0 0.0
        %821 = vmatprep.subr.mxu0 0.0
        %822 = vmatpush1.msra.mxu0 0.0
        %823 = vmatprep.subr.mxu0 0.0
        %824 = vmatpush1.msra.mxu0 0.0
        %825 = vmatprep.subr.mxu0 0.0
        %826 = vmatpush1.msra.mxu0 0.0
        %827 = vmatprep.subr.mxu0 0.0
        %828 = vmatpush1.msra.mxu0 0.0
        %829 = vmatprep.subr.mxu0 0.0
        %830 = vmatpush1.msra.mxu0 0.0
        %831 = vmatprep.subr.mxu0 0.0
        %832 = vmatpush1.msra.mxu0 0.0
        %833 = vmatprep.subr.mxu0 0.0
        %834 = vmatpush1.msra.mxu0 0.0
        %835 = vmatprep.subr.mxu0 0.0
        %836 = vmatpush1.msra.mxu0 0.0
        %837 = vmatprep.subr.mxu0 0.0
        %838 = vmatpush1.msra.mxu0 0.0
        %839 = vmatprep.mubr.f32.mxu0 0.0
        %840 = vmatmul.mubr.f32.gmra.mrb[0].mxu0 %v631
        %v841 = vpop.f32.mrb[0].mxu0
        %v842 = vadd.f32 %v757, %v841
        %v843 = vpop.f32.mrb[0].mxu0
        %844 = vmatprep.mubr.f32.mxu0 0.0
        %845 = vmatmul.mubr.f32.gmra.mrb[0].mxu0 %v632
        %v846 = vpop.f32.mrb[0].mxu0
        %v847 = vadd.f32 %v762, %v846
        %v848 = vpop.f32.mrb[0].mxu0
        %849 = vmatprep.mubr.f32.mxu0 0.0
        %850 = vmatmul.mubr.f32.gmra.mrb[0].mxu0 %v633
        %v851 = vpop.f32.mrb[0].mxu0
        %v852 = vadd.f32 %v767, %v851
        %v853 = vpop.f32.mrb[0].mxu0
        %854 = vmatprep.mubr.f32.mxu0 0.0
        %855 = vmatmul.mubr.f32.gmra.mrb[0].mxu0 %v634
        %v856 = vpop.f32.mrb[0].mxu0
        %v857 = vadd.f32 %v772, %v856
        %v858 = vpop.f32.mrb[0].mxu0
        %859 = vdwg.mxu0
        %v860 = vadd.f32 %v842, %v275
        %v861 = vadd.f32 %v847, %v276
        %v862 = vadd.f32 %v852, %v277
        %v863 = vadd.f32 %v857, %v278
        %v864 = vmax.f32 %v860, 0.0
        %v865 = vmax.f32 %v861, 0.0
        %v866 = vmax.f32 %v862, 0.0
        %v867 = vmax.f32 %v863, 0.0
        %868 = vst [vmem:[%s272] sm:$0xff] %v864
        %869 = vst [vmem:[%s272 + $0x8] sm:$0xff] %v865
        %870 = vst [vmem:[%s272 + $0x10] sm:$0xff] %v866
        %871 = vst [vmem:[%s272 + $0x18] sm:$0xff] %v867
        %s872 = sand.u32 %s141, 1
        %s873 = scalar_lea.sflag [#allocation4], %s872
        %s874 = sand.u32 %s141, 1
        %s875 = smul.addr %s874, 32
        %s876 = scalar_lea.vmem [#allocation8], %s875
        // Predicated region
        $region53: #{tpu_custom_call.1} parent=39 // pred_check
          %p877 = pneg %p151
        $region54: #{tpu_custom_call.1} parent=39 // pred_check_branch
          %879 = sbr.rel (%p877) target = $region56
        $region55: #{tpu_custom_call.1} parent=39 // pred_region
          %s880 = smul.u32 2, %s23
          %s882 = ssub.s32 512, 512
          %883 = vsyncadd %s873, %s882
          %s884 = smul.addr %s880, 2
          %s885 = smul.addr %s884, 128
          %s886 = scalar_lea.hbm %s5, %s885
          %s887 = sshll.u32 %s876, 4
          %s888 = int_to_ptr.vmem [resolvable:$true] %s887
          %893 = dma.vmem_to_hbm [thread:$0]  %s888, 512, %s886, %s873, 128, 128, 8
        $region56: #{tpu_custom_call.1} parent=39 // pred_fallthru
          _
      $region40: #{tpu_custom_call.1} parent=5 // pred_fallthru
        _
      %p894 = scmp.le.s32.totalorder 2, %s18
      // Predicated region
      $region57: #{tpu_custom_call.1} parent=5 // pred_check
        %p895 = pneg %p894
      $region58: #{tpu_custom_call.1} parent=5 // pred_check_branch
        %897 = sbr.rel (%p895) target = $region60
      $region59: #{tpu_custom_call.1} parent=5 // pred_region
        %s898 = ssub.s32 %s18, 2
        // Predicated region
        $region61: #{tpu_custom_call.1} parent=59 // pred_check
          %p899 = pneg %p157
        $region62: #{tpu_custom_call.1} parent=59 // pred_check_branch
          %901 = sbr.rel (%p899) target = $region64
        $region63: #{tpu_custom_call.1} parent=59 // pred_region
          %s902 = sand.u32 %s142, 1
          %s903 = scalar_lea.sflag [#allocation4], %s902
          %s904 = sand.u32 %s142, 1
          %s905 = smul.addr %s904, 32
          %s906 = scalar_lea.vmem [#allocation8], %s905
          %907 = dma.done %s903, 512
        $region64: #{tpu_custom_call.1} parent=59 // pred_fallthru
          _
      $region60: #{tpu_custom_call.1} parent=5 // pred_fallthru
        _
    $region6: #{tpu_custom_call.1} parent=1 // loop_footer
      %s22 = sadd.s32 1, %s18
    $region7: #{tpu_custom_call.1} parent=1 // loop_footer_branch
      %17 = sbr.rel target = $region3
    $region8: #{tpu_custom_call.1} parent=1 // loop_exit
      _
    %908 = vsyncpa [#allocation3], 1
    %s909 = scalar_lea.sflag [#allocation3], 1
    %910 = vsyncpa %s909, 1
    %911 = vsyncpa [#allocation6], 1
    %912 = vsyncpa [#allocation4], 1
    %s913 = scalar_lea.sflag [#allocation4], 1
    %914 = vsyncpa %s913, 1

// kernel: tpu_custom_call.1
$region0: #{tpu_custom_call.1}
  #allocation0 [shape = 'u32[]', space=smem, size = 0x4, offset = 0x4, fixed_abs, tag = 'smem constant byte address 0x4 - core index']
  #allocation1 [shape = 'u32[144,128]{1,0:T(1,128)}', space=vmem, size = 0x12000, scoped, tag = 'internal scratch']
  %s0 = inlined_call_operand.hbm [shape: f32[4,16,128], index: 0, kind: input, shape index: {}]
  %s1 = inlined_call_operand.hbm [shape: f32[384,128], index: 1, kind: input, shape index: {}]
  %s2 = inlined_call_operand.vmem [shape: f32[1,128], index: 2, kind: input, shape index: {}]
  %s3 = inlined_call_operand.hbm [shape: f32[384,128], index: 3, kind: input, shape index: {}]
  %s4 = inlined_call_operand.vmem [shape: f32[1,128], index: 4, kind: input, shape index: {}]
  %s5 = inlined_call_operand.hbm [shape: f32[4,16,128], index: 5, kind: output, shape index: {}]
  %s6 = sld [smem:[#allocation0]]
  $region65: #{tpu_custom_call.1} parent=0
    _
  %s8 = ssub.s32 1, %s6
  %s9 = scalar_select 0, %s8, %s6
  $region1: #{tpu_custom_call.1} parent=0
    #allocation2 [shape = 'u8[32768]{0}', space=vmem, size = 0x8000, scoped, tag = 'input window, operand 0']
    #allocation3 [shape = 's32[2]{0}', space=sflag, size = 0x8, scoped, tag = 'scoped memory for tpu_custom_call.1']
    #allocation4 [shape = 's32[2]{0}', space=sflag, size = 0x8, scoped, tag = 'scoped memory for tpu_custom_call.1']
    #allocation5 [shape = 'u8[196608]{0}', space=vmem, size = 0x30000, scoped, tag = 'input window, operand 1, single buffered']
    #allocation6 [shape = 's32[1]{0}', space=sflag, size = 0x4, scoped, tag = 'scoped memory for tpu_custom_call.1']
    #allocation7 [shape = 'u8[196608]{0}', space=vmem, size = 0x30000, scoped, tag = 'input window, operand 3, single buffered']
    #allocation8 [shape = 'u8[32768]{0}', space=vmem, size = 0x8000, scoped, tag = 'output window, operand 0']
    %10 = vsyncpa [#allocation3], 0
    %s11 = scalar_lea.sflag [#allocation3], 1
    %12 = vsyncpa %s11, 0
    %13 = vsyncpa [#allocation6], 0
    %14 = vsyncpa [#allocation4], 0
    %s15 = scalar_lea.sflag [#allocation4], 1
    %16 = vsyncpa %s15, 0
    loop: start=0, step=1, limit=4
    $region2: #{tpu_custom_call.1} parent=1 // loop_pre_header
      _
    $region3: #{tpu_custom_call.1} parent=1 // loop_header
      %s18 = sphi 0, %s22
      %p19 = scmp.ge.s32.totalorder %s18, 4
      %s28 = sphi 0, %s30
      %s31 = sphi 0, %s28
      %s32 = sphi 0, %s31
      %s48 = sphi 0, %s32
      %s52 = sphi 0, %s52
      %s54 = sphi 0, %s52
      %s55 = sphi 0, %s54
      %s69 = sphi 0, %s55
      %s73 = sphi 0, %s73
      %s75 = sphi 0, %s73
      %s76 = sphi 0, %s75
      %s90 = sphi 0, %s76
      %s94 = sphi 0, %s94
      %s96 = sphi 0, %s94
      %s97 = sphi 0, %s96
      %s111 = sphi 0, %s97
      %s115 = sphi 0, %s115
      %s117 = sphi 0, %s115
      %s118 = sphi 0, %s117
      %s132 = sphi 0, %s118
      %s138 = sphi 0, %s140
      %s141 = sphi 0, %s138
      %s142 = sphi 0, %s141
      %s158 = sphi 0, %s142
    $region4: #{tpu_custom_call.1} parent=1 // loop_header_branch
      %21 = sbr.rel (%p19) target = $region8
    $region5: #{tpu_custom_call.1} parent=1 // loop_body
      %s23 = ssub.s32 %s18, 1
      %s24 = ssub.s32 %s18, 2
      %s25 = sadd.s32 %s18, 1
      %s26 = ssub.s32 %s18, %s25
      %p27 = scmp.eq.s32.totalorder %s26, 0
      %s29 = sadd.s32 %s28, 1
      %s30 = scalar_select %p27, %s28, %s29
      %p33 = pneg %p27
      %p34 = scmp.eq.s32.totalorder %s18, 1
      %p35 = por %p33, %p34
      %p36 = scmp.ne.s32.totalorder %s28, %s31
      %p37 = scmp.eq.s32.totalorder %s18, 0
      %p38 = por %p36, %p37
      %p39 = scmp.ne.s32.totalorder %s28, %s31
      %p40 = scmp.eq.s32.totalorder %s23, 1
      %p41 = por %p39, %p40
      %p42 = scmp.ne.s32.totalorder %s31, %s32
      %p43 = scmp.eq.s32.totalorder %s23, 0
      %p44 = por %p42, %p43
      %p45 = scmp.ne.s32.totalorder %s31, %s32
      %p46 = scmp.eq.s32.totalorder %s24, 1
      %p47 = por %p45, %p46
      %p49 = scmp.ne.s32.totalorder %s32, %s48
      %p50 = scmp.eq.s32.totalorder %s24, 0
      %p51 = por %p49, %p50
      %s53 = sadd.s32 %s52, 1
      %p56 = scmp.eq.s32.totalorder %s18, 1
      %p57 = scmp.ne.s32.totalorder %s52, %s54
      %p58 = scmp.eq.s32.totalorder %s18, 0
      %p59 = por %p57, %p58
      %p60 = scmp.ne.s32.totalorder %s52, %s54
      %p61 = scmp.eq.s32.totalorder %s23, 1
      %p62 = por %p60, %p61
      %p63 = scmp.ne.s32.totalorder %s54, %s55
      %p64 = scmp.eq.s32.totalorder %s23, 0
      %p65 = por %p63, %p64
      %p66 = scmp.ne.s32.totalorder %s54, %s55
      %p67 = scmp.eq.s32.totalorder %s24, 1
      %p68 = por %p66, %p67
      %p70 = scmp.ne.s32.totalorder %s55, %s69
      %p71 = scmp.eq.s32.totalorder %s24, 0
      %p72 = por %p70, %p71
      %s74 = sadd.s32 %s73, 1
      %p77 = scmp.eq.s32.totalorder %s18, 1
      %p78 = scmp.ne.s32.totalorder %s73, %s75
      %p79 = scmp.eq.s32.totalorder %s18, 0
      %p80 = por %p78, %p79
      %p81 = scmp.ne.s32.totalorder %s73, %s75
      %p82 = scmp.eq.s32.totalorder %s23, 1
      %p83 = por %p81, %p82
      %p84 = scmp.ne.s32.totalorder %s75, %s76
      %p85 = scmp.eq.s32.totalorder %s23, 0
      %p86 = por %p84, %p85
      %p87 = scmp.ne.s32.totalorder %s75, %s76
      %p88 = scmp.eq.s32.totalorder %s24, 1
      %p89 = por %p87, %p88
      %p91 = scmp.ne.s32.totalorder %s76, %s90
      %p92 = scmp.eq.s32.totalorder %s24, 0
      %p93 = por %p91, %p92
      %s95 = sadd.s32 %s94, 1
      %p98 = scmp.eq.s32.totalorder %s18, 1
      %p99 = scmp.ne.s32.totalorder %s94, %s96
      %p100 = scmp.eq.s32.totalorder %s18, 0
      %p101 = por %p99, %p100
      %p102 = scmp.ne.s32.totalorder %s94, %s96
      %p103 = scmp.eq.s32.totalorder %s23, 1
      %p104 = por %p102, %p103
      %p105 = scmp.ne.s32.totalorder %s96, %s97
      %p106 = scmp.eq.s32.totalorder %s23, 0
      %p107 = por %p105, %p106
      %p108 = scmp.ne.s32.totalorder %s96, %s97
      %p109 = scmp.eq.s32.totalorder %s24, 1
      %p110 = por %p108, %p109
      %p112 = scmp.ne.s32.totalorder %s97, %s111
      %p113 = scmp.eq.s32.totalorder %s24, 0
      %p114 = por %p112, %p113
      %s116 = sadd.s32 %s115, 1
      %p119 = scmp.eq.s32.totalorder %s18, 1
      %p120 = scmp.ne.s32.totalorder %s115, %s117
      %p121 = scmp.eq.s32.totalorder %s18, 0
      %p122 = por %p120, %p121
      %p123 = scmp.ne.s32.totalorder %s115, %s117
      %p124 = scmp.eq.s32.totalorder %s23, 1
      %p125 = por %p123, %p124
      %p126 = scmp.ne.s32.totalorder %s117, %s118
      %p127 = scmp.eq.s32.totalorder %s23, 0
      %p128 = por %p126, %p127
      %p129 = scmp.ne.s32.totalorder %s117, %s118
      %p130 = scmp.eq.s32.totalorder %s24, 1
      %p131 = por %p129, %p130
      %p133 = scmp.ne.s32.totalorder %s118, %s132
      %p134 = scmp.eq.s32.totalorder %s24, 0
      %p135 = por %p133, %p134
      %s136 = ssub.s32 %s18, %s25
      %p137 = scmp.eq.s32.totalorder %s136, 0
      %s139 = sadd.s32 %s138, 1
      %s140 = scalar_select %p137, %s138, %s139
      %p143 = pneg %p137
      %p144 = scmp.eq.s32.totalorder %s18, 1
      %p145 = por %p143, %p144
      %p146 = scmp.ne.s32.totalorder %s138, %s141
      %p147 = scmp.eq.s32.totalorder %s18, 0
      %p148 = por %p146, %p147
      %p149 = scmp.ne.s32.totalorder %s138, %s141
      %p150 = scmp.eq.s32.totalorder %s23, 1
      %p151 = por %p149, %p150
      %p152 = scmp.ne.s32.totalorder %s141, %s142
      %p153 = scmp.eq.s32.totalorder %s23, 0
      %p154 = por %p152, %p153
      %p155 = scmp.ne.s32.totalorder %s141, %s142
      %p156 = scmp.eq.s32.totalorder %s24, 1
      %p157 = por %p155, %p156
      %p159 = scmp.ne.s32.totalorder %s142, %s158
      %p160 = scmp.eq.s32.totalorder %s24, 0
      %p161 = por %p159, %p160
      %p162 = scmp.le.s32.totalorder 1, %s18
      %p163 = scmp.lt.s32.totalorder %s18, 3
      %p164 = pnand %p162, %p163
      %p165 = pneg %p164
      // Predicated region
      $region9: #{tpu_custom_call.1} parent=5 // pred_check
        _
      $region10: #{tpu_custom_call.1} parent=5 // pred_check_branch
        %167 = sbr.rel (%p164) target = $region12
      $region11: #{tpu_custom_call.1} parent=5 // pred_region
        %s168 = ssub.s32 %s18, 1
        // Predicated region
        $region13: #{tpu_custom_call.1} parent=11 // pred_check
          %p169 = pneg %p65
        $region14: #{tpu_custom_call.1} parent=11 // pred_check_branch
          %171 = sbr.rel (%p169) target = $region16
        $region15: #{tpu_custom_call.1} parent=11 // pred_region
          %s173 = ssub.s32 6144, 6144
          %174 = vsyncadd [#allocation6], %s173
          %s175 = sshll.u32 [#allocation5], 4
          %s176 = int_to_ptr.vmem [resolvable:$true] %s175
          %181 = dma.hbm_to_vmem [thread:$0]  %s1, 6144, %s176, [#allocation6], 128, 128, 8
        $region16: #{tpu_custom_call.1} parent=11 // pred_fallthru
          _
        // Predicated region
        $region17: #{tpu_custom_call.1} parent=11 // pred_check
          %p182 = pneg %p86
        $region18: #{tpu_custom_call.1} parent=11 // pred_check_branch
          %184 = sbr.rel (%p182) target = $region20
        $region19: #{tpu_custom_call.1} parent=11 // pred_region
          _
        $region20: #{tpu_custom_call.1} parent=11 // pred_fallthru
          _
        // Predicated region
        $region21: #{tpu_custom_call.1} parent=11 // pred_check
          %p185 = pneg %p107
        $region22: #{tpu_custom_call.1} parent=11 // pred_check_branch
          %187 = sbr.rel (%p185) target = $region24
        $region23: #{tpu_custom_call.1} parent=11 // pred_region
          %s189 = ssub.s32 6144, 6144
          %190 = vsyncadd [#allocation6], %s189
          %s191 = sshll.u32 [#allocation7], 4
          %s192 = int_to_ptr.vmem [resolvable:$true] %s191
          %197 = dma.hbm_to_vmem [thread:$0]  %s3, 6144, %s192, [#allocation6], 128, 128, 8
        $region24: #{tpu_custom_call.1} parent=11 // pred_fallthru
          _
        // Predicated region
        $region25: #{tpu_custom_call.1} parent=11 // pred_check
          %p198 = pneg %p128
        $region26: #{tpu_custom_call.1} parent=11 // pred_check_branch
          %200 = sbr.rel (%p198) target = $region28
        $region27: #{tpu_custom_call.1} parent=11 // pred_region
          _
        $region28: #{tpu_custom_call.1} parent=11 // pred_fallthru
          _
      $region12: #{tpu_custom_call.1} parent=5 // pred_fallthru
        _
      %p201 = scmp.lt.s32.totalorder %s18, 2
      // Predicated region
      $region29: #{tpu_custom_call.1} parent=5 // pred_check
        %p202 = pneg %p201
      $region30: #{tpu_custom_call.1} parent=5 // pred_check_branch
        %204 = sbr.rel (%p202) target = $region32
      $region31: #{tpu_custom_call.1} parent=5 // pred_region
        // Predicated region
        $region33: #{tpu_custom_call.1} parent=31 // pred_check
          %p205 = pneg %p38
        $region34: #{tpu_custom_call.1} parent=31 // pred_check_branch
          %207 = sbr.rel (%p205) target = $region36
        $region35: #{tpu_custom_call.1} parent=31 // pred_region
          %s208 = sand.u32 %s28, 1
          %s209 = scalar_lea.sflag [#allocation3], %s208
          %s210 = sand.u32 %s28, 1
          %s211 = smul.addr %s210, 32
          %s212 = scalar_lea.vmem [#allocation2], %s211
          %s213 = smul.u32 2, %s18
          %s215 = ssub.s32 512, 512
          %216 = vsyncadd %s209, %s215
          %s217 = smul.addr %s213, 2
          %s218 = smul.addr %s217, 128
          %s219 = scalar_lea.hbm %s0, %s218
          %s220 = sshll.u32 %s212, 4
          %s221 = int_to_ptr.vmem [resolvable:$true] %s220
          %226 = dma.hbm_to_vmem [thread:$0]  %s219, 512, %s221, %s209, 128, 128, 8
        $region36: #{tpu_custom_call.1} parent=31 // pred_fallthru
          _
      $region32: #{tpu_custom_call.1} parent=5 // pred_fallthru
        _
      %p227 = scmp.le.s32.totalorder 1, %s18
      %p228 = scmp.lt.s32.totalorder %s18, 3
      %p229 = pnand %p227, %p228
      %p230 = pneg %p229
      // Predicated region
      $region37: #{tpu_custom_call.1} parent=5 // pred_check
        _
      $region38: #{tpu_custom_call.1} parent=5 // pred_check_branch
        %232 = sbr.rel (%p229) target = $region40
      $region39: #{tpu_custom_call.1} parent=5 // pred_region
        %s233 = ssub.s32 %s18, 1
        %s234 = sand.u32 %s31, 1
        %s235 = scalar_lea.sflag [#allocation3], %s234
        %s236 = sand.u32 %s31, 1
        %s237 = smul.addr %s236, 32
        %s238 = scalar_lea.vmem [#allocation2], %s237
        // Predicated region
        $region41: #{tpu_custom_call.1} parent=39 // pred_check
          %p239 = pneg %p44
        $region42: #{tpu_custom_call.1} parent=39 // pred_check_branch
          %241 = sbr.rel (%p239) target = $region44
        $region43: #{tpu_custom_call.1} parent=39 // pred_region
          %242 = dma.done %s235, 512
        $region44: #{tpu_custom_call.1} parent=39 // pred_fallthru
          _
        // Predicated region
        $region45: #{tpu_custom_call.1} parent=39 // pred_check
          %p243 = pneg %p65
        $region46: #{tpu_custom_call.1} parent=39 // pred_check_branch
          %245 = sbr.rel (%p243) target = $region48
        $region47: #{tpu_custom_call.1} parent=39 // pred_region
          %246 = dma.done [#allocation6], 6144
        $region48: #{tpu_custom_call.1} parent=39 // pred_fallthru
          _
        // Predicated region
        $region49: #{tpu_custom_call.1} parent=39 // pred_check
          %p247 = pneg %p107
        $region50: #{tpu_custom_call.1} parent=39 // pred_check_branch
          %249 = sbr.rel (%p247) target = $region52
        $region51: #{tpu_custom_call.1} parent=39 // pred_region
          %250 = dma.done [#allocation6], 6144
        $region52: #{tpu_custom_call.1} parent=39 // pred_fallthru
          _
        %s251 = sand.u32 %s31, 1
        %s252 = scalar_lea.sflag [#allocation3], %s251
        %s253 = sand.u32 %s31, 1
        %s254 = smul.addr %s253, 32
        %s255 = scalar_lea.vmem [#allocation2], %s254
        %p256 = pneg %p44
        %p257 = pneg %p41
        %p258 = pneg %p65
        %p259 = pneg %p62
        %p260 = pneg %p86
        %p261 = pneg %p83
        %p262 = pneg %p107
        %p263 = pneg %p104
        %p264 = pneg %p128
        %p265 = pneg %p125
        %p266 = pneg %p154
        %p267 = pneg %p151
        %s268 = sand.u32 %s141, 1
        %s269 = scalar_lea.sflag [#allocation4], %s268
        %s270 = sand.u32 %s141, 1
        %s271 = smul.addr %s270, 32
        %s272 = scalar_lea.vmem [#allocation8], %s271
        %s273 = smul.u32 2, %s23
        %s274 = smul.u32 2, %s23
        %v275 = vld [vmem:[%s238] sm:$0xff]
        %v276 = vld [vmem:[%s238 + $0x8] sm:$0xff]
        %v277 = vld [vmem:[%s238 + $0x10] sm:$0xff]
        %v278 = vld [vmem:[%s238 + $0x18] sm:$0xff]
        %v279 = vlaneseq
        %v280 = vshrl.u32 %v279, 7
        %v281 = vadd.s32 %v280, 8
        %v282 = vadd.s32 %v280, 16
        %v283 = vadd.s32 %v280, 24
        %vm284 = vcmp.lt.s32.totalorder %v280, 0
        %v285 = vsub.s32 0, %v280
        %v286 = vsel %vm284, %v285, %v280
        %v287 = vshrl.u32 %v286, 4
        %v288 = vand.u32 %v286, 15
        %v289 = vsub.s32 0, %v288
        %v290 = vsel %vm284, %v289, %v288
        %vm291 = vcmp.lt.s32.totalorder %v281, 0
        %v292 = vsub.s32 0, %v281
        %v293 = vsel %vm291, %v292, %v281
        %v294 = vshrl.u32 %v293, 4
        %v295 = vand.u32 %v293, 15
        %v296 = vsub.s32 0, %v295
        %v297 = vsel %vm291, %v296, %v295
        %vm298 = vcmp.lt.s32.totalorder %v282, 0
        %v299 = vsub.s32 0, %v282
        %v300 = vsel %vm298, %v299, %v282
        %v301 = vshrl.u32 %v300, 4
        %v302 = vand.u32 %v300, 15
        %v303 = vsub.s32 0, %v302
        %v304 = vsel %vm298, %v303, %v302
        %vm305 = vcmp.lt.s32.totalorder %v283, 0
        %v306 = vsub.s32 0, %v283
        %v307 = vsel %vm305, %v306, %v283
        %v308 = vshrl.u32 %v307, 4
        %v309 = vand.u32 %v307, 15
        %v310 = vsub.s32 0, %v309
        %v311 = vsel %vm305, %v310, %v309
        %vm312 = vcmp.ne.s32.totalorder %v290, 0
        %vm313 = vcmp.ne.s32.totalorder %v297, 0
        %vm314 = vcmp.ne.s32.totalorder %v304, 0
        %vm315 = vcmp.ne.s32.totalorder %v311, 0
        %vm316 = vcmp.lt.s32.totalorder %v290, 0
        %vm317 = vcmp.lt.s32.totalorder %v297, 0
        %vm318 = vcmp.lt.s32.totalorder %v304, 0
        %vm319 = vcmp.lt.s32.totalorder %v311, 0
        %vm320 = vmand %vm316, %vm312
        %vm321 = vmand %vm317, %vm313
        %vm322 = vmand %vm318, %vm314
        %vm323 = vmand %vm319, %vm315
        %v324 = vadd.s32 %v290, 16
        %v325 = vadd.s32 %v297, 16
        %v326 = vadd.s32 %v304, 16
        %v327 = vadd.s32 %v311, 16
        %v328 = vsel %vm320, %v324, %v290
        %v329 = vsel %vm321, %v325, %v297
        %v330 = vsel %vm322, %v326, %v304
        %v331 = vsel %vm323, %v327, %v311
        %vm332 = vcmp.ne.s32.totalorder %v328, 0
        %vm333 = vcmp.ne.s32.totalorder %v329, 0
        %vm334 = vcmp.ne.s32.totalorder %v330, 0
        %vm335 = vcmp.ne.s32.totalorder %v331, 0
        %vm336 = vcmp.ne.s32.totalorder %v328, 15
        %vm337 = vcmp.ne.s32.totalorder %v329, 15
        %vm338 = vcmp.ne.s32.totalorder %v330, 15
        %vm339 = vcmp.ne.s32.totalorder %v331, 15
        %vm344 = vcmask 1040384
        %v345 = vrot.slane %v275, 7
        %v346 = vrot.slane %v276, 7
        %v347 = vsel %vm344, %v345, %v346
        %v348 = vrot.slane %v277, 7
        %v349 = vsel %vm344, %v346, %v348
        %v350 = vrot.slane %v278, 7
        %v351 = vsel %vm344, %v348, %v350
        %v356 = vsel %vm344, 0.0, %v345
        %v357 = vsel %vm332, 1, 0
        %v358 = vsel %vm333, 1, 0
        %v359 = vsel %vm334, 1, 0
        %v360 = vsel %vm335, 1, 0
        %vm361 = vcmp.eq.s32.totalorder %v357, 1
        %vm362 = vcmp.eq.s32.totalorder %v358, 1
        %vm363 = vcmp.eq.s32.totalorder %v359, 1
        %vm364 = vcmp.eq.s32.totalorder %v360, 1
        %v365 = vsel %vm361, %v356, 0.0
        %v366 = vsel %vm362, %v347, 0.0
        %v367 = vsel %vm363, %v349, 0.0
        %v368 = vsel %vm364, %v351, 0.0
        %vm369 = vcmask 1046528
        %v370 = vrot.slane %v275, 1
        %v371 = vrot.slane %v276, 1
        %v372 = vsel %vm369, %v370, %v371
        %v373 = vrot.slane %v277, 1
        %v374 = vsel %vm369, %v371, %v373
        %v375 = vrot.slane %v278, 1
        %v376 = vsel %vm369, %v373, %v375
        %v381 = vsel %vm369, %v375, 0.0
        %v382 = vsel %vm336, 1, 0
        %v383 = vsel %vm337, 1, 0
        %v384 = vsel %vm338, 1, 0
        %v385 = vsel %vm339, 1, 0
        %vm386 = vcmp.eq.s32.totalorder %v382, 1
        %vm387 = vcmp.eq.s32.totalorder %v383, 1
        %vm388 = vcmp.eq.s32.totalorder %v384, 1
        %vm389 = vcmp.eq.s32.totalorder %v385, 1
        %v390 = vsel %vm386, %v372, 0.0
        %v391 = vsel %vm387, %v374, 0.0
        %v392 = vsel %vm388, %v376, 0.0
        %v393 = vsel %vm389, %v381, 0.0
        %v394 = vld [vmem:[#allocation5] sm:$0xff]
        %v395 = vld [vmem:[#allocation5 + $0x8] sm:$0xff]
        %v396 = vld [vmem:[#allocation5 + $0x10] sm:$0xff]
        %v397 = vld [vmem:[#allocation5 + $0x18] sm:$0xff]
        %v398 = vld [vmem:[#allocation5 + $0x20] sm:$0xff]
        %v399 = vld [vmem:[#allocation5 + $0x28] sm:$0xff]
        %v400 = vld [vmem:[#allocation5 + $0x30] sm:$0xff]
        %v401 = vld [vmem:[#allocation5 + $0x38] sm:$0xff]
        %v402 = vld [vmem:[#allocation5 + $0x40] sm:$0xff]
        %v403 = vld [vmem:[#allocation5 + $0x48] sm:$0xff]
        %v404 = vld [vmem:[#allocation5 + $0x50] sm:$0xff]
        %v405 = vld [vmem:[#allocation5 + $0x58] sm:$0xff]
        %v406 = vld [vmem:[#allocation5 + $0x60] sm:$0xff]
        %v407 = vld [vmem:[#allocation5 + $0x68] sm:$0xff]
        %v408 = vld [vmem:[#allocation5 + $0x70] sm:$0xff]
        %v409 = vld [vmem:[#allocation5 + $0x78] sm:$0xff]
        %v410 = vld [vmem:[#allocation5 + $0x80] sm:$0xff]
        %v411 = vld [vmem:[#allocation5 + $0x88] sm:$0xff]
        %v412 = vld [vmem:[#allocation5 + $0x90] sm:$0xff]
        %v413 = vld [vmem:[#allocation5 + $0x98] sm:$0xff]
        %v414 = vld [vmem:[#allocation5 + $0xa0] sm:$0xff]
        %v415 = vld [vmem:[#allocation5 + $0xa8] sm:$0xff]
        %v416 = vld [vmem:[#allocation5 + $0xb0] sm:$0xff]
        %v417 = vld [vmem:[#allocation5 + $0xb8] sm:$0xff]
        %v418 = vld [vmem:[#allocation5 + $0xc0] sm:$0xff]
        %v419 = vld [vmem:[#allocation5 + $0xc8] sm:$0xff]
        %v420 = vld [vmem:[#allocation5 + $0xd0] sm:$0xff]
        %v421 = vld [vmem:[#allocation5 + $0xd8] sm:$0xff]
        %v422 = vld [vmem:[#allocation5 + $0xe0] sm:$0xff]
        %v423 = vld [vmem:[#allocation5 + $0xe8] sm:$0xff]
        %v424 = vld [vmem:[#allocation5 + $0xf0] sm:$0xff]
        %v425 = vld [vmem:[#allocation5 + $0xf8] sm:$0xff]
        %v426 = vld [vmem:[#allocation5 + $0x100] sm:$0xff]
        %v427 = vld [vmem:[#allocation5 + $0x108] sm:$0xff]
        %v428 = vld [vmem:[#allocation5 + $0x110] sm:$0xff]
        %v429 = vld [vmem:[#allocation5 + $0x118] sm:$0xff]
        %v430 = vld [vmem:[#allocation5 + $0x120] sm:$0xff]
        %v431 = vld [vmem:[#allocation5 + $0x128] sm:$0xff]
        %v432 = vld [vmem:[#allocation5 + $0x130] sm:$0xff]
        %v433 = vld [vmem:[#allocation5 + $0x138] sm:$0xff]
        %v434 = vld [vmem:[#allocation5 + $0x140] sm:$0xff]
        %v435 = vld [vmem:[#allocation5 + $0x148] sm:$0xff]
        %v436 = vld [vmem:[#allocation5 + $0x150] sm:$0xff]
        %v437 = vld [vmem:[#allocation5 + $0x158] sm:$0xff]
        %v438 = vld [vmem:[#allocation5 + $0x160] sm:$0xff]
        %v439 = vld [vmem:[#allocation5 + $0x168] sm:$0xff]
        %v440 = vld [vmem:[#allocation5 + $0x170] sm:$0xff]
        %v441 = vld [vmem:[#allocation5 + $0x178] sm:$0xff]
        %v442 = vld [vmem:[%s2] sm:$0x1]
        %v444 = vlaneseq
        %v445 = vshrl.u32 %v444, 7
        %v446 = vsub.s32 0, %v445
        %v447 = vrot.slane %v442, %v446
        %449 = vmatprep.subr.mxu0 0.0
        %450 = vmatpush1.msra.mxu0 %v394
        %451 = vmatprep.subr.mxu0 0.0
        %452 = vmatpush1.msra.mxu0 %v395
        %453 = vmatprep.subr.mxu0 0.0
        %454 = vmatpush1.msra.mxu0 %v396
        %455 = vmatprep.subr.mxu0 0.0
        %456 = vmatpush1.msra.mxu0 %v397
        %457 = vmatprep.subr.mxu0 0.0
        %458 = vmatpush1.msra.mxu0 %v398
        %459 = vmatprep.subr.mxu0 0.0
        %460 = vmatpush1.msra.mxu0 %v399
        %461 = vmatprep.subr.mxu0 0.0
        %462 = vmatpush1.msra.mxu0 %v400
        %463 = vmatprep.subr.mxu0 0.0
        %464 = vmatpush1.msra.mxu0 %v401
        %465 = vmatprep.subr.mxu0 0.0
        %466 = vmatpush1.msra.mxu0 %v402
        %467 = vmatprep.subr.mxu0 0.0
        %468 = vmatpush1.msra.mxu0 %v403
        %469 = vmatprep.subr.mxu0 0.0
        %470 = vmatpush1.msra.mxu0 %v404
        %471 = vmatprep.subr.mxu0 0.0
        %472 = vmatpush1.msra.mxu0 %v405
        %473 = vmatprep.subr.mxu0 0.0
        %474 = vmatpush1.msra.mxu0 %v406
        %475 = vmatprep.subr.mxu0 0.0
        %476 = vmatpush1.msra.mxu0 %v407
        %477 = vmatprep.subr.mxu0 0.0
        %478 = vmatpush1.msra.mxu0 %v408
        %479 = vmatprep.subr.mxu0 0.0
        %480 = vmatpush1.msra.mxu0 %v409
        %481 = vmatprep.subr.mxu0 0.0
        %482 = vmatpush1.msra.mxu0 %v410
        %483 = vmatprep.subr.mxu0 0.0
        %484 = vmatpush1.msra.mxu0 %v411
        %485 = vmatprep.subr.mxu0 0.0
        %486 = vmatpush1.msra.mxu0 %v412
        %487 = vmatprep.subr.mxu0 0.0
        %488 = vmatpush1.msra.mxu0 %v413
        %489 = vmatprep.subr.mxu0 0.0
        %490 = vmatpush1.msra.mxu0 %v414
        %491 = vmatprep.subr.mxu0 0.0
        %492 = vmatpush1.msra.mxu0 %v415
        %493 = vmatprep.subr.mxu0 0.0
        %494 = vmatpush1.msra.mxu0 %v416
        %495 = vmatprep.subr.mxu0 0.0
        %496 = vmatpush1.msra.mxu0 %v417
        %497 = vmatprep.subr.mxu0 0.0
        %498 = vmatpush1.msra.mxu0 %v418
        %499 = vmatprep.subr.mxu0 0.0
        %500 = vmatpush1.msra.mxu0 %v419
        %501 = vmatprep.subr.mxu0 0.0
        %502 = vmatpush1.msra.mxu0 %v420
        %503 = vmatprep.subr.mxu0 0.0
        %504 = vmatpush1.msra.mxu0 %v421
        %505 = vmatprep.subr.mxu0 0.0
        %506 = vmatpush1.msra.mxu0 %v422
        %507 = vmatprep.subr.mxu0 0.0
        %508 = vmatpush1.msra.mxu0 %v423
        %509 = vmatprep.subr.mxu0 0.0
        %510 = vmatpush1.msra.mxu0 %v424
        %511 = vmatprep.subr.mxu0 0.0
        %512 = vmatpush1.msra.mxu0 %v425
        %513 = vmatprep.mubr.f32.mxu0 %v275
        %514 = vmatmul.mubr.f32.gmra.mrb[0].mxu0 %v365
        %v515 = vpop.f32.mrb[0].mxu0
        %v516 = vadd.f32 %v447, %v515
        %v517 = vpop.f32.mrb[0].mxu0
        %518 = vmatprep.mubr.f32.mxu0 %v276
        %519 = vmatmul.mubr.f32.gmra.mrb[0].mxu0 %v366
        %v520 = vpop.f32.mrb[0].mxu0
        %v521 = vadd.f32 %v447, %v520
        %v522 = vpop.f32.mrb[0].mxu0
        %523 = vmatprep.mubr.f32.mxu0 %v277
        %524 = vmatmul.mubr.f32.gmra.mrb[0].mxu0 %v367
        %v525 = vpop.f32.mrb[0].mxu0
        %v526 = vadd.f32 %v447, %v525
        %v527 = vpop.f32.mrb[0].mxu0
        %528 = vmatprep.mubr.f32.mxu0 %v278
        %529 = vmatmul.mubr.f32.gmra.mrb[0].mxu0 %v368
        %v530 = vpop.f32.mrb[0].mxu0
        %v531 = vadd.f32 %v447, %v530
        %v532 = vpop.f32.mrb[0].mxu0
        %533 = vdwg.mxu0
        %534 = vmatprep.subr.mxu0 0.0
        %535 = vmatpush1.msra.mxu0 %v426
        %536 = vmatprep.subr.mxu0 0.0
        %537 = vmatpush1.msra.mxu0 %v427
        %538 = vmatprep.subr.mxu0 0.0
        %539 = vmatpush1.msra.mxu0 %v428
        %540 = vmatprep.subr.mxu0 0.0
        %541 = vmatpush1.msra.mxu0 %v429
        %542 = vmatprep.subr.mxu0 0.0
        %543 = vmatpush1.msra.mxu0 %v430
        %544 = vmatprep.subr.mxu0 0.0
        %545 = vmatpush1.msra.mxu0 %v431
        %546 = vmatprep.subr.mxu0 0.0
        %547 = vmatpush1.msra.mxu0 %v432
        %548 = vmatprep.subr.mxu0 0.0
        %549 = vmatpush1.msra.mxu0 %v433
        %550 = vmatprep.subr.mxu0 0.0
        %551 = vmatpush1.msra.mxu0 %v434
        %552 = vmatprep.subr.mxu0 0.0
        %553 = vmatpush1.msra.mxu0 %v435
        %554 = vmatprep.subr.mxu0 0.0
        %555 = vmatpush1.msra.mxu0 %v436
        %556 = vmatprep.subr.mxu0 0.0
        %557 = vmatpush1.msra.mxu0 %v437
        %558 = vmatprep.subr.mxu0 0.0
        %559 = vmatpush1.msra.mxu0 %v438
        %560 = vmatprep.subr.mxu0 0.0
        %561 = vmatpush1.msra.mxu0 %v439
        %562 = vmatprep.subr.mxu0 0.0
        %563 = vmatpush1.msra.mxu0 %v440
        %564 = vmatprep.subr.mxu0 0.0
        %565 = vmatpush1.msra.mxu0 %v441
        %566 = vmatprep.subr.mxu0 0.0
        %567 = vmatpush1.msra.mxu0 0.0
        %568 = vmatprep.subr.mxu0 0.0
        %569 = vmatpush1.msra.mxu0 0.0
        %570 = vmatprep.subr.mxu0 0.0
        %571 = vmatpush1.msra.mxu0 0.0
        %572 = vmatprep.subr.mxu0 0.0
        %573 = vmatpush1.msra.mxu0 0.0
        %574 = vmatprep.subr.mxu0 0.0
        %575 = vmatpush1.msra.mxu0 0.0
        %576 = vmatprep.subr.mxu0 0.0
        %577 = vmatpush1.msra.mxu0 0.0
        %578 = vmatprep.subr.mxu0 0.0
        %579 = vmatpush1.msra.mxu0 0.0
        %580 = vmatprep.subr.mxu0 0.0
        %581 = vmatpush1.msra.mxu0 0.0
        %582 = vmatprep.subr.mxu0 0.0
        %583 = vmatpush1.msra.mxu0 0.0
        %584 = vmatprep.subr.mxu0 0.0
        %585 = vmatpush1.msra.mxu0 0.0
        %586 = vmatprep.subr.mxu0 0.0
        %587 = vmatpush1.msra.mxu0 0.0
        %588 = vmatprep.subr.mxu0 0.0
        %589 = vmatpush1.msra.mxu0 0.0
        %590 = vmatprep.subr.mxu0 0.0
        %591 = vmatpush1.msra.mxu0 0.0
        %592 = vmatprep.subr.mxu0 0.0
        %593 = vmatpush1.msra.mxu0 0.0
        %594 = vmatprep.subr.mxu0 0.0
        %595 = vmatpush1.msra.mxu0 0.0
        %596 = vmatprep.subr.mxu0 0.0
        %597 = vmatpush1.msra.mxu0 0.0
        %598 = vmatprep.mubr.f32.mxu0 0.0
        %599 = vmatmul.mubr.f32.gmra.mrb[0].mxu0 %v390
        %v600 = vpop.f32.mrb[0].mxu0
        %v601 = vadd.f32 %v516, %v600
        %v602 = vpop.f32.mrb[0].mxu0
        %603 = vmatprep.mubr.f32.mxu0 0.0
        %604 = vmatmul.mubr.f32.gmra.mrb[0].mxu0 %v391
        %v605 = vpop.f32.mrb[0].mxu0
        %v606 = vadd.f32 %v521, %v605
        %v607 = vpop.f32.mrb[0].mxu0
        %608 = vmatprep.mubr.f32.mxu0 0.0
        %609 = vmatmul.mubr.f32.gmra.mrb[0].mxu0 %v392
        %v610 = vpop.f32.mrb[0].mxu0
        %v611 = vadd.f32 %v526, %v610
        %v612 = vpop.f32.mrb[0].mxu0
        %613 = vmatprep.mubr.f32.mxu0 0.0
        %614 = vmatmul.mubr.f32.gmra.mrb[0].mxu0 %v393
        %v615 = vpop.f32.mrb[0].mxu0
        %v616 = vadd.f32 %v531, %v615
        %v617 = vpop.f32.mrb[0].mxu0
        %618 = vdwg.mxu0
        %v619 = vmax.f32 %v601, 0.0
        %v620 = vmax.f32 %v606, 0.0
        %v621 = vmax.f32 %v611, 0.0
        %v622 = vmax.f32 %v616, 0.0
        %v627 = vrot.slane %v619, 7
        %v628 = vrot.slane %v620, 7
        %v629 = vsel %vm344, %v627, %v628
        %v630 = vrot.slane %v621, 7
        %v631 = vsel %vm344, %v628, %v630
        %v632 = vrot.slane %v622, 7
        %v633 = vsel %vm344, %v630, %v632
        %v638 = vsel %vm344, 0.0, %v627
        %v639 = vsel %vm361, %v638, 0.0
        %v640 = vsel %vm362, %v629, 0.0
        %v641 = vsel %vm363, %v631, 0.0
        %v642 = vsel %vm364, %v633, 0.0
        %v643 = vrot.slane %v619, 1
        %v644 = vrot.slane %v620, 1
        %v645 = vsel %vm369, %v643, %v644
        %v646 = vrot.slane %v621, 1
        %v647 = vsel %vm369, %v644, %v646
        %v648 = vrot.slane %v622, 1
        %v649 = vsel %vm369, %v646, %v648
        %v654 = vsel %vm369, %v648, 0.0
        %v655 = vsel %vm386, %v645, 0.0
        %v656 = vsel %vm387, %v647, 0.0
        %v657 = vsel %vm388, %v649, 0.0
        %v658 = vsel %vm389, %v654, 0.0
        %v659 = vld [vmem:[#allocation7] sm:$0xff]
        %v660 = vld [vmem:[#allocation7 + $0x8] sm:$0xff]
        %v661 = vld [vmem:[#allocation7 + $0x10] sm:$0xff]
        %v662 = vld [vmem:[#allocation7 + $0x18] sm:$0xff]
        %v663 = vld [vmem:[#allocation7 + $0x20] sm:$0xff]
        %v664 = vld [vmem:[#allocation7 + $0x28] sm:$0xff]
        %v665 = vld [vmem:[#allocation7 + $0x30] sm:$0xff]
        %v666 = vld [vmem:[#allocation7 + $0x38] sm:$0xff]
        %v667 = vld [vmem:[#allocation7 + $0x40] sm:$0xff]
        %v668 = vld [vmem:[#allocation7 + $0x48] sm:$0xff]
        %v669 = vld [vmem:[#allocation7 + $0x50] sm:$0xff]
        %v670 = vld [vmem:[#allocation7 + $0x58] sm:$0xff]
        %v671 = vld [vmem:[#allocation7 + $0x60] sm:$0xff]
        %v672 = vld [vmem:[#allocation7 + $0x68] sm:$0xff]
        %v673 = vld [vmem:[#allocation7 + $0x70] sm:$0xff]
        %v674 = vld [vmem:[#allocation7 + $0x78] sm:$0xff]
        %v675 = vld [vmem:[#allocation7 + $0x80] sm:$0xff]
        %v676 = vld [vmem:[#allocation7 + $0x88] sm:$0xff]
        %v677 = vld [vmem:[#allocation7 + $0x90] sm:$0xff]
        %v678 = vld [vmem:[#allocation7 + $0x98] sm:$0xff]
        %v679 = vld [vmem:[#allocation7 + $0xa0] sm:$0xff]
        %v680 = vld [vmem:[#allocation7 + $0xa8] sm:$0xff]
        %v681 = vld [vmem:[#allocation7 + $0xb0] sm:$0xff]
        %v682 = vld [vmem:[#allocation7 + $0xb8] sm:$0xff]
        %v683 = vld [vmem:[#allocation7 + $0xc0] sm:$0xff]
        %v684 = vld [vmem:[#allocation7 + $0xc8] sm:$0xff]
        %v685 = vld [vmem:[#allocation7 + $0xd0] sm:$0xff]
        %v686 = vld [vmem:[#allocation7 + $0xd8] sm:$0xff]
        %v687 = vld [vmem:[#allocation7 + $0xe0] sm:$0xff]
        %v688 = vld [vmem:[#allocation7 + $0xe8] sm:$0xff]
        %v689 = vld [vmem:[#allocation7 + $0xf0] sm:$0xff]
        %v690 = vld [vmem:[#allocation7 + $0xf8] sm:$0xff]
        %v691 = vld [vmem:[#allocation7 + $0x100] sm:$0xff]
        %v692 = vld [vmem:[#allocation7 + $0x108] sm:$0xff]
        %v693 = vld [vmem:[#allocation7 + $0x110] sm:$0xff]
        %v694 = vld [vmem:[#allocation7 + $0x118] sm:$0xff]
        %v695 = vld [vmem:[#allocation7 + $0x120] sm:$0xff]
        %v696 = vld [vmem:[#allocation7 + $0x128] sm:$0xff]
        %v697 = vld [vmem:[#allocation7 + $0x130] sm:$0xff]
        %v698 = vld [vmem:[#allocation7 + $0x138] sm:$0xff]
        %v699 = vld [vmem:[#allocation7 + $0x140] sm:$0xff]
        %v700 = vld [vmem:[#allocation7 + $0x148] sm:$0xff]
        %v701 = vld [vmem:[#allocation7 + $0x150] sm:$0xff]
        %v702 = vld [vmem:[#allocation7 + $0x158] sm:$0xff]
        %v703 = vld [vmem:[#allocation7 + $0x160] sm:$0xff]
        %v704 = vld [vmem:[#allocation7 + $0x168] sm:$0xff]
        %v705 = vld [vmem:[#allocation7 + $0x170] sm:$0xff]
        %v706 = vld [vmem:[#allocation7 + $0x178] sm:$0xff]
        %v707 = vld [vmem:[%s4] sm:$0x1]
        %v709 = vlaneseq
        %v710 = vshrl.u32 %v709, 7
        %v711 = vsub.s32 0, %v710
        %v712 = vrot.slane %v707, %v711
        %714 = vmatprep.subr.mxu0 0.0
        %715 = vmatpush1.msra.mxu0 %v659
        %716 = vmatprep.subr.mxu0 0.0
        %717 = vmatpush1.msra.mxu0 %v660
        %718 = vmatprep.subr.mxu0 0.0
        %719 = vmatpush1.msra.mxu0 %v661
        %720 = vmatprep.subr.mxu0 0.0
        %721 = vmatpush1.msra.mxu0 %v662
        %722 = vmatprep.subr.mxu0 0.0
        %723 = vmatpush1.msra.mxu0 %v663
        %724 = vmatprep.subr.mxu0 0.0
        %725 = vmatpush1.msra.mxu0 %v664
        %726 = vmatprep.subr.mxu0 0.0
        %727 = vmatpush1.msra.mxu0 %v665
        %728 = vmatprep.subr.mxu0 0.0
        %729 = vmatpush1.msra.mxu0 %v666
        %730 = vmatprep.subr.mxu0 0.0
        %731 = vmatpush1.msra.mxu0 %v667
        %732 = vmatprep.subr.mxu0 0.0
        %733 = vmatpush1.msra.mxu0 %v668
        %734 = vmatprep.subr.mxu0 0.0
        %735 = vmatpush1.msra.mxu0 %v669
        %736 = vmatprep.subr.mxu0 0.0
        %737 = vmatpush1.msra.mxu0 %v670
        %738 = vmatprep.subr.mxu0 0.0
        %739 = vmatpush1.msra.mxu0 %v671
        %740 = vmatprep.subr.mxu0 0.0
        %741 = vmatpush1.msra.mxu0 %v672
        %742 = vmatprep.subr.mxu0 0.0
        %743 = vmatpush1.msra.mxu0 %v673
        %744 = vmatprep.subr.mxu0 0.0
        %745 = vmatpush1.msra.mxu0 %v674
        %746 = vmatprep.subr.mxu0 0.0
        %747 = vmatpush1.msra.mxu0 %v675
        %748 = vmatprep.subr.mxu0 0.0
        %749 = vmatpush1.msra.mxu0 %v676
        %750 = vmatprep.subr.mxu0 0.0
        %751 = vmatpush1.msra.mxu0 %v677
        %752 = vmatprep.subr.mxu0 0.0
        %753 = vmatpush1.msra.mxu0 %v678
        %754 = vmatprep.subr.mxu0 0.0
        %755 = vmatpush1.msra.mxu0 %v679
        %756 = vmatprep.subr.mxu0 0.0
        %757 = vmatpush1.msra.mxu0 %v680
        %758 = vmatprep.subr.mxu0 0.0
        %759 = vmatpush1.msra.mxu0 %v681
        %760 = vmatprep.subr.mxu0 0.0
        %761 = vmatpush1.msra.mxu0 %v682
        %762 = vmatprep.subr.mxu0 0.0
        %763 = vmatpush1.msra.mxu0 %v683
        %764 = vmatprep.subr.mxu0 0.0
        %765 = vmatpush1.msra.mxu0 %v684
        %766 = vmatprep.subr.mxu0 0.0
        %767 = vmatpush1.msra.mxu0 %v685
        %768 = vmatprep.subr.mxu0 0.0
        %769 = vmatpush1.msra.mxu0 %v686
        %770 = vmatprep.subr.mxu0 0.0
        %771 = vmatpush1.msra.mxu0 %v687
        %772 = vmatprep.subr.mxu0 0.0
        %773 = vmatpush1.msra.mxu0 %v688
        %774 = vmatprep.subr.mxu0 0.0
        %775 = vmatpush1.msra.mxu0 %v689
        %776 = vmatprep.subr.mxu0 0.0
        %777 = vmatpush1.msra.mxu0 %v690
        %778 = vmatprep.mubr.f32.mxu0 %v619
        %779 = vmatmul.mubr.f32.gmra.mrb[0].mxu0 %v639
        %v780 = vpop.f32.mrb[0].mxu0
        %v781 = vadd.f32 %v712, %v780
        %v782 = vpop.f32.mrb[0].mxu0
        %783 = vmatprep.mubr.f32.mxu0 %v620
        %784 = vmatmul.mubr.f32.gmra.mrb[0].mxu0 %v640
        %v785 = vpop.f32.mrb[0].mxu0
        %v786 = vadd.f32 %v712, %v785
        %v787 = vpop.f32.mrb[0].mxu0
        %788 = vmatprep.mubr.f32.mxu0 %v621
        %789 = vmatmul.mubr.f32.gmra.mrb[0].mxu0 %v641
        %v790 = vpop.f32.mrb[0].mxu0
        %v791 = vadd.f32 %v712, %v790
        %v792 = vpop.f32.mrb[0].mxu0
        %793 = vmatprep.mubr.f32.mxu0 %v622
        %794 = vmatmul.mubr.f32.gmra.mrb[0].mxu0 %v642
        %v795 = vpop.f32.mrb[0].mxu0
        %v796 = vadd.f32 %v712, %v795
        %v797 = vpop.f32.mrb[0].mxu0
        %798 = vdwg.mxu0
        %799 = vmatprep.subr.mxu0 0.0
        %800 = vmatpush1.msra.mxu0 %v691
        %801 = vmatprep.subr.mxu0 0.0
        %802 = vmatpush1.msra.mxu0 %v692
        %803 = vmatprep.subr.mxu0 0.0
        %804 = vmatpush1.msra.mxu0 %v693
        %805 = vmatprep.subr.mxu0 0.0
        %806 = vmatpush1.msra.mxu0 %v694
        %807 = vmatprep.subr.mxu0 0.0
        %808 = vmatpush1.msra.mxu0 %v695
        %809 = vmatprep.subr.mxu0 0.0
        %810 = vmatpush1.msra.mxu0 %v696
        %811 = vmatprep.subr.mxu0 0.0
        %812 = vmatpush1.msra.mxu0 %v697
        %813 = vmatprep.subr.mxu0 0.0
        %814 = vmatpush1.msra.mxu0 %v698
        %815 = vmatprep.subr.mxu0 0.0
        %816 = vmatpush1.msra.mxu0 %v699
        %817 = vmatprep.subr.mxu0 0.0
        %818 = vmatpush1.msra.mxu0 %v700
        %819 = vmatprep.subr.mxu0 0.0
        %820 = vmatpush1.msra.mxu0 %v701
        %821 = vmatprep.subr.mxu0 0.0
        %822 = vmatpush1.msra.mxu0 %v702
        %823 = vmatprep.subr.mxu0 0.0
        %824 = vmatpush1.msra.mxu0 %v703
        %825 = vmatprep.subr.mxu0 0.0
        %826 = vmatpush1.msra.mxu0 %v704
        %827 = vmatprep.subr.mxu0 0.0
        %828 = vmatpush1.msra.mxu0 %v705
        %829 = vmatprep.subr.mxu0 0.0
        %830 = vmatpush1.msra.mxu0 %v706
        %831 = vmatprep.subr.mxu0 0.0
        %832 = vmatpush1.msra.mxu0 0.0
        %833 = vmatprep.subr.mxu0 0.0
        %834 = vmatpush1.msra.mxu0 0.0
        %835 = vmatprep.subr.mxu0 0.0
        %836 = vmatpush1.msra.mxu0 0.0
        %837 = vmatprep.subr.mxu0 0.0
        %838 = vmatpush1.msra.mxu0 0.0
        %839 = vmatprep.subr.mxu0 0.0
        %840 = vmatpush1.msra.mxu0 0.0
        %841 = vmatprep.subr.mxu0 0.0
        %842 = vmatpush1.msra.mxu0 0.0
        %843 = vmatprep.subr.mxu0 0.0
        %844 = vmatpush1.msra.mxu0 0.0
        %845 = vmatprep.subr.mxu0 0.0
        %846 = vmatpush1.msra.mxu0 0.0
        %847 = vmatprep.subr.mxu0 0.0
        %848 = vmatpush1.msra.mxu0 0.0
        %849 = vmatprep.subr.mxu0 0.0
        %850 = vmatpush1.msra.mxu0 0.0
        %851 = vmatprep.subr.mxu0 0.0
        %852 = vmatpush1.msra.mxu0 0.0
        %853 = vmatprep.subr.mxu0 0.0
        %854 = vmatpush1.msra.mxu0 0.0
        %855 = vmatprep.subr.mxu0 0.0
        %856 = vmatpush1.msra.mxu0 0.0
        %857 = vmatprep.subr.mxu0 0.0
        %858 = vmatpush1.msra.mxu0 0.0
        %859 = vmatprep.subr.mxu0 0.0
        %860 = vmatpush1.msra.mxu0 0.0
        %861 = vmatprep.subr.mxu0 0.0
        %862 = vmatpush1.msra.mxu0 0.0
        %863 = vmatprep.mubr.f32.mxu0 0.0
        %864 = vmatmul.mubr.f32.gmra.mrb[0].mxu0 %v655
        %v865 = vpop.f32.mrb[0].mxu0
        %v866 = vadd.f32 %v781, %v865
        %v867 = vpop.f32.mrb[0].mxu0
        %868 = vmatprep.mubr.f32.mxu0 0.0
        %869 = vmatmul.mubr.f32.gmra.mrb[0].mxu0 %v656
        %v870 = vpop.f32.mrb[0].mxu0
        %v871 = vadd.f32 %v786, %v870
        %v872 = vpop.f32.mrb[0].mxu0
        %873 = vmatprep.mubr.f32.mxu0 0.0
        %874 = vmatmul.mubr.f32.gmra.mrb[0].mxu0 %v657
        %v875 = vpop.f32.mrb[0].mxu0
        %v876 = vadd.f32 %v791, %v875
        %v877 = vpop.f32.mrb[0].mxu0
        %878 = vmatprep.mubr.f32.mxu0 0.0
        %879 = vmatmul.mubr.f32.gmra.mrb[0].mxu0 %v658
        %v880 = vpop.f32.mrb[0].mxu0
        %v881 = vadd.f32 %v796, %v880
        %v882 = vpop.f32.mrb[0].mxu0
        %883 = vdwg.mxu0
        %v884 = vadd.f32 %v866, %v275
        %v885 = vadd.f32 %v871, %v276
        %v886 = vadd.f32 %v876, %v277
        %v887 = vadd.f32 %v881, %v278
        %v888 = vmax.f32 %v884, 0.0
        %v889 = vmax.f32 %v885, 0.0
        %v890 = vmax.f32 %v886, 0.0
        %v891 = vmax.f32 %v887, 0.0
        %892 = vst [vmem:[%s272] sm:$0xff] %v888
        %893 = vst [vmem:[%s272 + $0x8] sm:$0xff] %v889
        %894 = vst [vmem:[%s272 + $0x10] sm:$0xff] %v890
        %895 = vst [vmem:[%s272 + $0x18] sm:$0xff] %v891
        %s896 = sand.u32 %s141, 1
        %s897 = scalar_lea.sflag [#allocation4], %s896
        %s898 = sand.u32 %s141, 1
        %s899 = smul.addr %s898, 32
        %s900 = scalar_lea.vmem [#allocation8], %s899
        // Predicated region
        $region53: #{tpu_custom_call.1} parent=39 // pred_check
          %p901 = pneg %p151
        $region54: #{tpu_custom_call.1} parent=39 // pred_check_branch
          %903 = sbr.rel (%p901) target = $region56
        $region55: #{tpu_custom_call.1} parent=39 // pred_region
          %s904 = smul.u32 2, %s23
          %s906 = ssub.s32 512, 512
          %907 = vsyncadd %s897, %s906
          %s908 = smul.addr %s904, 2
          %s909 = smul.addr %s908, 128
          %s910 = scalar_lea.hbm %s5, %s909
          %s911 = sshll.u32 %s900, 4
          %s912 = int_to_ptr.vmem [resolvable:$true] %s911
          %917 = dma.vmem_to_hbm [thread:$0]  %s912, 512, %s910, %s897, 128, 128, 8
        $region56: #{tpu_custom_call.1} parent=39 // pred_fallthru
          _
      $region40: #{tpu_custom_call.1} parent=5 // pred_fallthru
        _
      %p918 = scmp.le.s32.totalorder 2, %s18
      // Predicated region
      $region57: #{tpu_custom_call.1} parent=5 // pred_check
        %p919 = pneg %p918
      $region58: #{tpu_custom_call.1} parent=5 // pred_check_branch
        %921 = sbr.rel (%p919) target = $region60
      $region59: #{tpu_custom_call.1} parent=5 // pred_region
        %s922 = ssub.s32 %s18, 2
        // Predicated region
        $region61: #{tpu_custom_call.1} parent=59 // pred_check
          %p923 = pneg %p157
        $region62: #{tpu_custom_call.1} parent=59 // pred_check_branch
          %925 = sbr.rel (%p923) target = $region64
        $region63: #{tpu_custom_call.1} parent=59 // pred_region
          %s926 = sand.u32 %s142, 1
          %s927 = scalar_lea.sflag [#allocation4], %s926
          %s928 = sand.u32 %s142, 1
          %s929 = smul.addr %s928, 32
          %s930 = scalar_lea.vmem [#allocation8], %s929
          %931 = dma.done %s927, 512
        $region64: #{tpu_custom_call.1} parent=59 // pred_fallthru
          _
      $region60: #{tpu_custom_call.1} parent=5 // pred_fallthru
        _
    $region6: #{tpu_custom_call.1} parent=1 // loop_footer
      %s22 = sadd.s32 1, %s18
    $region7: #{tpu_custom_call.1} parent=1 // loop_footer_branch
      %17 = sbr.rel target = $region3
    $region8: #{tpu_custom_call.1} parent=1 // loop_exit
      _
    %932 = vsyncpa [#allocation3], 1
    %s933 = scalar_lea.sflag [#allocation3], 1
    %934 = vsyncpa %s933, 1
    %935 = vsyncpa [#allocation6], 1
    %936 = vsyncpa [#allocation4], 1
    %s937 = scalar_lea.sflag [#allocation4], 1
    %938 = vsyncpa %s937, 1

</llo_original>
